<compile_context>
chip_gen: v7x
topology: tpu7x:2x2x1
jax: 0.10.0
libtpu: 0.0.40
codegen_flags: <defaults>
</compile_context>

<pallas_src>
import math

import jax
import jax.numpy as jnp
from jax.experimental import pallas as pl
from jax.experimental.pallas import tpu as pltpu

# ---- model hyper-parameters (args.*) -------------------------------------
BATCH = 2
SEQ = 8
HIDDEN = 32
N_HEADS = 4
D_HEAD = HIDDEN // N_HEADS
HIDDEN_DROPOUT_PROB = 0.0  # dropout with p=0 / eval mode -> identity
# TODO(synk): non-zero hidden_dropout_prob (training-mode dropout) not implemented;
#             with p=0.0 the reference nn.Dropout is exactly the identity.
# NOTE: bf16 operands for the MXU (v6e/v7x suggestion) only pay off at real BERT
#       sizes; kept f32 here to preserve tight numerics at these toy shapes.


def mhsa_kernel(x_ref, mask_ref, wqkv_ref, bqkv_ref, h_ref, scores_ref):
    """Single invocation: whole problem fits in VMEM at these shapes.

    x_ref:      (B*S, H)        flattened activations
    mask_ref:   (B, S)          1.0 = keep
    wqkv_ref:   (H, 3H)         fused [Wq | Wk | Wv]
    bqkv_ref:   (1, 3H)         fused [bq | bk | bv]
    h_ref:      (B*S, H)        merged-head output (lane-dense store)
    scores_ref: (B*S, NH*S)     attention probs, [b*S+q, h*S+k] (lane-dense store)
    """
    xf = x_ref[...]                                              # (B*S, H)

    # One fused MXU matmul for Q, K, V.
    qkv = jnp.dot(xf, wqkv_ref[...],
                  preferred_element_type=jnp.float32) + bqkv_ref[...]   # (B*S, 3H)

    inv_sqrt_d = 1.0 / math.sqrt(D_HEAD)
    q = qkv[:, :HIDDEN] * inv_sqrt_d          # fold 1/sqrt(d) into q once
    k = qkv[:, HIDDEN:2 * HIDDEN]
    v = qkv[:, 2 * HIDDEN:]

    neg = 10000.0 * (1.0 - mask_ref[...])     # (B, S), broadcast over query rows

    h_rows = []
    score_rows = []
    # Static loops: BATCH and N_HEADS are small compile-time constants.
    for b in range(BATCH):
        rows = slice(b * SEQ, (b + 1) * SEQ)
        neg_b = neg[b:b + 1, :]               # (1, S)
        head_h = []
        head_p = []
        for hd in range(N_HEADS):
            cols = slice(hd * D_HEAD, (hd + 1) * D_HEAD)
            qh = q[rows, cols]                # (S, D)
            kh = k[rows, cols]
            vh = v[rows, cols]

            sc = jnp.dot(qh, kh.T, preferred_element_type=jnp.float32) - neg_b
            # numerically stable softmax; normalize via EUP reciprocal
            sc = sc - jnp.max(sc, axis=-1, keepdims=True)
            p = jnp.exp(sc)
            p = p * pl.reciprocal(jnp.sum(p, axis=-1, keepdims=True), approx=True)

            head_p.append(p)                                              # (S, S)
            head_h.append(jnp.dot(p, vh, preferred_element_type=jnp.float32))

        h_rows.append(jnp.concatenate(head_h, axis=-1))       # (S, H)
        score_rows.append(jnp.concatenate(head_p, axis=-1))   # (S, NH*S)

    # Single contiguous stores (no per-head masked partial stores).
    h_ref[...] = jnp.concatenate(h_rows, axis=0)              # (B*S, H)
    scores_ref[...] = jnp.concatenate(score_rows, axis=0)     # (B*S, NH*S)


def multi_headed_self_attention(x, mask, params):
    """x: (B, S, H) f32; mask: (B, S) f32 (1.0 = keep). Returns (h, scores)."""
    B, S, H = x.shape
    xf = x.reshape(B * S, H)
    mask_f = mask.astype(jnp.float32)                          # (B, S)

    # Fuse QKV projections in the wrapper.
    wqkv = jnp.concatenate([params["wq"], params["wk"], params["wv"]], axis=1)  # (H, 3H)
    bqkv = jnp.concatenate([params["bq"], params["bk"], params["bv"]],
                           axis=0).reshape(1, 3 * H)                            # (1, 3H)

    h_flat, scores_flat = pl.pallas_call(
        mhsa_kernel,
        out_shape=(
            jax.ShapeDtypeStruct((B * S, H), jnp.float32),
            jax.ShapeDtypeStruct((B * S, N_HEADS * S), jnp.float32),
        ),
        grid=(1,),
        in_specs=[
            pl.BlockSpec((B * S, H), lambda i: (0, 0)),            # x (flattened)
            pl.BlockSpec((B, S), lambda i: (0, 0)),                # mask
            pl.BlockSpec((H, 3 * H), lambda i: (0, 0)),            # fused Wqkv
            pl.BlockSpec((1, 3 * H), lambda i: (0, 0)),            # fused bqkv
        ],
        out_specs=(
            pl.BlockSpec((B * S, H), lambda i: (0, 0)),            # h
            pl.BlockSpec((B * S, N_HEADS * S), lambda i: (0, 0)),  # scores (lane-dense)
        ),
        compiler_params=pltpu.CompilerParams(
            dimension_semantics=("arbitrary",)),
    )(xf, mask_f, wqkv, bqkv)

    h = h_flat.reshape(B, S, H)
    # scores_flat[b*S+q, hd*S+k] -> (B, NH, S, S)
    scores = scores_flat.reshape(B, S, N_HEADS, S).transpose(0, 2, 1, 3)
    return h, scores


def reference(x, mask, params):
    """Plain-JAX reference mirroring the PyTorch forward."""
    B, S, H = x.shape
    q = x @ params["wq"] + params["bq"]
    k = x @ params["wk"] + params["bk"]
    v = x @ params["wv"] + params["bv"]

    def split(t):  # (B,S,H) -> (B,heads,S,d)
        return t.reshape(B, S, N_HEADS, D_HEAD).transpose(0, 2, 1, 3)

    q, k, v = split(q), split(k), split(v)
    scores = jnp.einsum("bhqd,bhkd->bhqk", q, k) / math.sqrt(D_HEAD)
    m = mask[:, None, None, :].astype(jnp.float32)
    scores = scores - 10000.0 * (1.0 - m)
    scores = jax.nn.softmax(scores, axis=-1)
    h = jnp.einsum("bhqk,bhkd->bhqd", scores, v)
    h = h.transpose(0, 2, 1, 3).reshape(B, S, H)
    return h, scores


if __name__ == "__main__":
    key = jax.random.PRNGKey(0)
    kx, kwq, kbq, kwk, kbk, kwv, kbv = jax.random.split(key, 7)

    x = jax.random.normal(kx, (BATCH, SEQ, HIDDEN), dtype=jnp.float32)

    # mask: batch 0 fully valid, batch 1 has the last 2 positions masked out
    valid_len = jnp.array([SEQ, SEQ - 2])
    mask = (jnp.arange(SEQ)[None, :] < valid_len[:, None]).astype(jnp.float32)

    scale = 1.0 / math.sqrt(HIDDEN)
    params = {
        "wq": jax.random.uniform(kwq, (HIDDEN, HIDDEN), jnp.float32, -scale, scale),
        "bq": jax.random.uniform(kbq, (HIDDEN,), jnp.float32, -scale, scale),
        "wk": jax.random.uniform(kwk, (HIDDEN, HIDDEN), jnp.float32, -scale, scale),
        "bk": jax.random.uniform(kbk, (HIDDEN,), jnp.float32, -scale, scale),
        "wv": jax.random.uniform(kwv, (HIDDEN, HIDDEN), jnp.float32, -scale, scale),
        "bv": jax.random.uniform(kbv, (HIDDEN,), jnp.float32, -scale, scale),
    }

    h_out, scores = multi_headed_self_attention(x, mask, params)
    jax.block_until_ready((h_out, scores))

    h_ref, s_ref = reference(x, mask, params)
    # Tolerance slightly loosened vs f32-exact because softmax normalization uses
    # the EUP approximate reciprocal (pl.reciprocal(..., approx=True)).
    assert jnp.allclose(h_out, h_ref, atol=2e-3, rtol=2e-3), "h mismatch"
    assert jnp.allclose(scores, s_ref, atol=2e-3, rtol=2e-3), "scores mismatch"

    print("KERNEL_OK")
</pallas_src>

<mosaic_0001>
module attributes {stable_mosaic.version = 11 : i64} {
  func.func @mhsa_kernel(%arg0: i32, %arg1: memref<16x32xf32, #tpu.memory_space<vmem>>, %arg2: memref<2x8xf32, #tpu.memory_space<vmem>>, %arg3: memref<32x96xf32, #tpu.memory_space<vmem>>, %arg4: memref<1x96xf32, #tpu.memory_space<vmem>>, %arg5: memref<16x32xf32, #tpu.memory_space<vmem>>, %arg6: memref<16x32xf32, #tpu.memory_space<vmem>>) attributes {dimension_semantics = [#tpu.dimension_semantics<arbitrary>], iteration_bounds = array<i64: 1>, scalar_prefetch = 0 : i64, scratch_operands = 0 : i64, tpu.core_type = #tpu.core_type<tc>, window_params = [{pipeline_mode = #tpu.pipeline_mode<synchronous>, transform_indices = @transform_0, window_bounds = array<i64: 16, 32>}, {pipeline_mode = #tpu.pipeline_mode<synchronous>, transform_indices = @transform_1, window_bounds = array<i64: 2, 8>}, {pipeline_mode = #tpu.pipeline_mode<synchronous>, transform_indices = @transform_2, window_bounds = array<i64: 32, 96>}, {pipeline_mode = #tpu.pipeline_mode<synchronous>, transform_indices = @transform_3, window_bounds = array<i64: 1, 96>}, {pipeline_mode = #tpu.pipeline_mode<synchronous>, transform_indices = @transform_4, window_bounds = array<i64: 16, 32>}, {pipeline_mode = #tpu.pipeline_mode<synchronous>, transform_indices = @transform_5, window_bounds = array<i64: 16, 32>}]} {
    %c0 = arith.constant 0 : index
    %c0_0 = arith.constant 0 : index
    %0 = vector.load %arg1[%c0, %c0_0] : memref<16x32xf32, #tpu.memory_space<vmem>>, vector<16x32xf32>
    %c0_1 = arith.constant 0 : index
    %c0_2 = arith.constant 0 : index
    %1 = vector.load %arg3[%c0_1, %c0_2] : memref<32x96xf32, #tpu.memory_space<vmem>>, vector<32x96xf32>
    %cst = arith.constant dense<0.000000e+00> : vector<16x96xf32>
    %2 = tpu.matmul %0, %1, %cst {dimension_numbers = #tpu.dot_dimension_numbers<[1], [0], [0], [1], [0, 0, 1, 1], [], []>} : vector<16x32xf32>, vector<32x96xf32>, vector<16x96xf32> -> vector<16x96xf32>
    %c0_3 = arith.constant 0 : index
    %c0_4 = arith.constant 0 : index
    %3 = vector.load %arg4[%c0_3, %c0_4] : memref<1x96xf32, #tpu.memory_space<vmem>>, vector<1x96xf32>
    %4 = vector.broadcast %3 : vector<1x96xf32> to vector<16x96xf32>
    %5 = arith.addf %2, %4 : vector<16x96xf32>
    %6 = vector.extract_strided_slice %5 {offsets = [0, 0], sizes = [16, 32], strides = [1, 1]} : vector<16x96xf32> to vector<16x32xf32>
    %cst_5 = arith.constant 0.353553385 : f32
    %7 = vector.broadcast %cst_5 : f32 to vector<16x32xf32>
    %8 = arith.mulf %6, %7 : vector<16x32xf32>
    %9 = vector.extract_strided_slice %5 {offsets = [0, 32], sizes = [16, 32], strides = [1, 1]} : vector<16x96xf32> to vector<16x32xf32>
    %10 = vector.extract_strided_slice %5 {offsets = [0, 64], sizes = [16, 32], strides = [1, 1]} : vector<16x96xf32> to vector<16x32xf32>
    %c0_6 = arith.constant 0 : index
    %c0_7 = arith.constant 0 : index
    %11 = vector.load %arg2[%c0_6, %c0_7] : memref<2x8xf32, #tpu.memory_space<vmem>>, vector<2x8xf32>
    %cst_8 = arith.constant 1.000000e+00 : f32
    %12 = vector.broadcast %cst_8 : f32 to vector<2x8xf32>
    %13 = arith.subf %12, %11 : vector<2x8xf32>
    %cst_9 = arith.constant 1.000000e+04 : f32
    %14 = vector.broadcast %cst_9 : f32 to vector<2x8xf32>
    %15 = arith.mulf %14, %13 : vector<2x8xf32>
    %16 = vector.extract_strided_slice %15 {offsets = [0, 0], sizes = [1, 8], strides = [1, 1]} : vector<2x8xf32> to vector<1x8xf32>
    %17 = vector.extract_strided_slice %8 {offsets = [0, 0], sizes = [8, 8], strides = [1, 1]} : vector<16x32xf32> to vector<8x8xf32>
    %18 = vector.extract_strided_slice %9 {offsets = [0, 0], sizes = [8, 8], strides = [1, 1]} : vector<16x32xf32> to vector<8x8xf32>
    %19 = vector.extract_strided_slice %10 {offsets = [0, 0], sizes = [8, 8], strides = [1, 1]} : vector<16x32xf32> to vector<8x8xf32>
    %20 = tpu.transpose %18, [1, 0] : vector<8x8xf32> -> vector<8x8xf32>
    %cst_10 = arith.constant dense<0.000000e+00> : vector<8x8xf32>
    %21 = tpu.matmul %17, %20, %cst_10 {dimension_numbers = #tpu.dot_dimension_numbers<[1], [0], [0], [1], [0, 0, 1, 1], [], []>} : vector<8x8xf32>, vector<8x8xf32>, vector<8x8xf32> -> vector<8x8xf32>
    %22 = vector.broadcast %16 : vector<1x8xf32> to vector<8x8xf32>
    %23 = arith.subf %21, %22 : vector<8x8xf32>
    %cst_11 = arith.constant dense<0xFF800000> : vector<8xf32>
    %24 = vector.multi_reduction <maximumf>, %23, %cst_11 [1] : vector<8x8xf32> to vector<8xf32>
    %25 = vector.shape_cast %24 : vector<8xf32> to vector<8x1xf32>
    %26 = vector.broadcast %25 : vector<8x1xf32> to vector<8x8xf32>
    %27 = arith.subf %23, %26 : vector<8x8xf32>
    %28 = math.exp %27 : vector<8x8xf32>
    %cst_12 = arith.constant dense<0.000000e+00> : vector<8xf32>
    %29 = vector.multi_reduction <add>, %28, %cst_12 [1] : vector<8x8xf32> to vector<8xf32>
    %30 = vector.shape_cast %29 : vector<8xf32> to vector<8x1xf32>
    %31 = tpu.reciprocal %30 {approx = true} : vector<8x1xf32> -> vector<8x1xf32>
    %32 = vector.broadcast %31 : vector<8x1xf32> to vector<8x8xf32>
    %33 = arith.mulf %28, %32 : vector<8x8xf32>
    %cst_13 = arith.constant dense<0.000000e+00> : vector<8x8xf32>
    %34 = tpu.matmul %33, %19, %cst_13 {dimension_numbers = #tpu.dot_dimension_numbers<[1], [0], [0], [1], [0, 0, 1, 1], [], []>} : vector<8x8xf32>, vector<8x8xf32>, vector<8x8xf32> -> vector<8x8xf32>
    %35 = vector.extract_strided_slice %8 {offsets = [0, 8], sizes = [8, 8], strides = [1, 1]} : vector<16x32xf32> to vector<8x8xf32>
    %36 = vector.extract_strided_slice %9 {offsets = [0, 8], sizes = [8, 8], strides = [1, 1]} : vector<16x32xf32> to vector<8x8xf32>
    %37 = vector.extract_strided_slice %10 {offsets = [0, 8], sizes = [8, 8], strides = [1, 1]} : vector<16x32xf32> to vector<8x8xf32>
    %38 = tpu.transpose %36, [1, 0] : vector<8x8xf32> -> vector<8x8xf32>
    %cst_14 = arith.constant dense<0.000000e+00> : vector<8x8xf32>
    %39 = tpu.matmul %35, %38, %cst_14 {dimension_numbers = #tpu.dot_dimension_numbers<[1], [0], [0], [1], [0, 0, 1, 1], [], []>} : vector<8x8xf32>, vector<8x8xf32>, vector<8x8xf32> -> vector<8x8xf32>
    %40 = vector.broadcast %16 : vector<1x8xf32> to vector<8x8xf32>
    %41 = arith.subf %39, %40 : vector<8x8xf32>
    %cst_15 = arith.constant dense<0xFF800000> : vector<8xf32>
    %42 = vector.multi_reduction <maximumf>, %41, %cst_15 [1] : vector<8x8xf32> to vector<8xf32>
    %43 = vector.shape_cast %42 : vector<8xf32> to vector<8x1xf32>
    %44 = vector.broadcast %43 : vector<8x1xf32> to vector<8x8xf32>
    %45 = arith.subf %41, %44 : vector<8x8xf32>
    %46 = math.exp %45 : vector<8x8xf32>
    %cst_16 = arith.constant dense<0.000000e+00> : vector<8xf32>
    %47 = vector.multi_reduction <add>, %46, %cst_16 [1] : vector<8x8xf32> to vector<8xf32>
    %48 = vector.shape_cast %47 : vector<8xf32> to vector<8x1xf32>
    %49 = tpu.reciprocal %48 {approx = true} : vector<8x1xf32> -> vector<8x1xf32>
    %50 = vector.broadcast %49 : vector<8x1xf32> to vector<8x8xf32>
    %51 = arith.mulf %46, %50 : vector<8x8xf32>
    %cst_17 = arith.constant dense<0.000000e+00> : vector<8x8xf32>
    %52 = tpu.matmul %51, %37, %cst_17 {dimension_numbers = #tpu.dot_dimension_numbers<[1], [0], [0], [1], [0, 0, 1, 1], [], []>} : vector<8x8xf32>, vector<8x8xf32>, vector<8x8xf32> -> vector<8x8xf32>
    %53 = vector.extract_strided_slice %8 {offsets = [0, 16], sizes = [8, 8], strides = [1, 1]} : vector<16x32xf32> to vector<8x8xf32>
    %54 = vector.extract_strided_slice %9 {offsets = [0, 16], sizes = [8, 8], strides = [1, 1]} : vector<16x32xf32> to vector<8x8xf32>
    %55 = vector.extract_strided_slice %10 {offsets = [0, 16], sizes = [8, 8], strides = [1, 1]} : vector<16x32xf32> to vector<8x8xf32>
    %56 = tpu.transpose %54, [1, 0] : vector<8x8xf32> -> vector<8x8xf32>
    %cst_18 = arith.constant dense<0.000000e+00> : vector<8x8xf32>
    %57 = tpu.matmul %53, %56, %cst_18 {dimension_numbers = #tpu.dot_dimension_numbers<[1], [0], [0], [1], [0, 0, 1, 1], [], []>} : vector<8x8xf32>, vector<8x8xf32>, vector<8x8xf32> -> vector<8x8xf32>
    %58 = vector.broadcast %16 : vector<1x8xf32> to vector<8x8xf32>
    %59 = arith.subf %57, %58 : vector<8x8xf32>
    %cst_19 = arith.constant dense<0xFF800000> : vector<8xf32>
    %60 = vector.multi_reduction <maximumf>, %59, %cst_19 [1] : vector<8x8xf32> to vector<8xf32>
    %61 = vector.shape_cast %60 : vector<8xf32> to vector<8x1xf32>
    %62 = vector.broadcast %61 : vector<8x1xf32> to vector<8x8xf32>
    %63 = arith.subf %59, %62 : vector<8x8xf32>
    %64 = math.exp %63 : vector<8x8xf32>
    %cst_20 = arith.constant dense<0.000000e+00> : vector<8xf32>
    %65 = vector.multi_reduction <add>, %64, %cst_20 [1] : vector<8x8xf32> to vector<8xf32>
    %66 = vector.shape_cast %65 : vector<8xf32> to vector<8x1xf32>
    %67 = tpu.reciprocal %66 {approx = true} : vector<8x1xf32> -> vector<8x1xf32>
    %68 = vector.broadcast %67 : vector<8x1xf32> to vector<8x8xf32>
    %69 = arith.mulf %64, %68 : vector<8x8xf32>
    %cst_21 = arith.constant dense<0.000000e+00> : vector<8x8xf32>
    %70 = tpu.matmul %69, %55, %cst_21 {dimension_numbers = #tpu.dot_dimension_numbers<[1], [0], [0], [1], [0, 0, 1, 1], [], []>} : vector<8x8xf32>, vector<8x8xf32>, vector<8x8xf32> -> vector<8x8xf32>
    %71 = vector.extract_strided_slice %8 {offsets = [0, 24], sizes = [8, 8], strides = [1, 1]} : vector<16x32xf32> to vector<8x8xf32>
    %72 = vector.extract_strided_slice %9 {offsets = [0, 24], sizes = [8, 8], strides = [1, 1]} : vector<16x32xf32> to vector<8x8xf32>
    %73 = vector.extract_strided_slice %10 {offsets = [0, 24], sizes = [8, 8], strides = [1, 1]} : vector<16x32xf32> to vector<8x8xf32>
    %74 = tpu.transpose %72, [1, 0] : vector<8x8xf32> -> vector<8x8xf32>
    %cst_22 = arith.constant dense<0.000000e+00> : vector<8x8xf32>
    %75 = tpu.matmul %71, %74, %cst_22 {dimension_numbers = #tpu.dot_dimension_numbers<[1], [0], [0], [1], [0, 0, 1, 1], [], []>} : vector<8x8xf32>, vector<8x8xf32>, vector<8x8xf32> -> vector<8x8xf32>
    %76 = vector.broadcast %16 : vector<1x8xf32> to vector<8x8xf32>
    %77 = arith.subf %75, %76 : vector<8x8xf32>
    %cst_23 = arith.constant dense<0xFF800000> : vector<8xf32>
    %78 = vector.multi_reduction <maximumf>, %77, %cst_23 [1] : vector<8x8xf32> to vector<8xf32>
    %79 = vector.shape_cast %78 : vector<8xf32> to vector<8x1xf32>
    %80 = vector.broadcast %79 : vector<8x1xf32> to vector<8x8xf32>
    %81 = arith.subf %77, %80 : vector<8x8xf32>
    %82 = math.exp %81 : vector<8x8xf32>
    %cst_24 = arith.constant dense<0.000000e+00> : vector<8xf32>
    %83 = vector.multi_reduction <add>, %82, %cst_24 [1] : vector<8x8xf32> to vector<8xf32>
    %84 = vector.shape_cast %83 : vector<8xf32> to vector<8x1xf32>
    %85 = tpu.reciprocal %84 {approx = true} : vector<8x1xf32> -> vector<8x1xf32>
    %86 = vector.broadcast %85 : vector<8x1xf32> to vector<8x8xf32>
    %87 = arith.mulf %82, %86 : vector<8x8xf32>
    %cst_25 = arith.constant dense<0.000000e+00> : vector<8x8xf32>
    %88 = tpu.matmul %87, %73, %cst_25 {dimension_numbers = #tpu.dot_dimension_numbers<[1], [0], [0], [1], [0, 0, 1, 1], [], []>} : vector<8x8xf32>, vector<8x8xf32>, vector<8x8xf32> -> vector<8x8xf32>
    %89 = tpu.concatenate %34, %52, %70, %88 in 1 : vector<8x8xf32>, vector<8x8xf32>, vector<8x8xf32>, vector<8x8xf32> -> vector<8x32xf32>
    %90 = tpu.concatenate %33, %51, %69, %87 in 1 : vector<8x8xf32>, vector<8x8xf32>, vector<8x8xf32>, vector<8x8xf32> -> vector<8x32xf32>
    %91 = vector.extract_strided_slice %15 {offsets = [1, 0], sizes = [1, 8], strides = [1, 1]} : vector<2x8xf32> to vector<1x8xf32>
    %92 = vector.extract_strided_slice %8 {offsets = [8, 0], sizes = [8, 8], strides = [1, 1]} : vector<16x32xf32> to vector<8x8xf32>
    %93 = vector.extract_strided_slice %9 {offsets = [8, 0], sizes = [8, 8], strides = [1, 1]} : vector<16x32xf32> to vector<8x8xf32>
    %94 = vector.extract_strided_slice %10 {offsets = [8, 0], sizes = [8, 8], strides = [1, 1]} : vector<16x32xf32> to vector<8x8xf32>
    %95 = tpu.transpose %93, [1, 0] : vector<8x8xf32> -> vector<8x8xf32>
    %cst_26 = arith.constant dense<0.000000e+00> : vector<8x8xf32>
    %96 = tpu.matmul %92, %95, %cst_26 {dimension_numbers = #tpu.dot_dimension_numbers<[1], [0], [0], [1], [0, 0, 1, 1], [], []>} : vector<8x8xf32>, vector<8x8xf32>, vector<8x8xf32> -> vector<8x8xf32>
    %97 = vector.broadcast %91 : vector<1x8xf32> to vector<8x8xf32>
    %98 = arith.subf %96, %97 : vector<8x8xf32>
    %cst_27 = arith.constant dense<0xFF800000> : vector<8xf32>
    %99 = vector.multi_reduction <maximumf>, %98, %cst_27 [1] : vector<8x8xf32> to vector<8xf32>
    %100 = vector.shape_cast %99 : vector<8xf32> to vector<8x1xf32>
    %101 = vector.broadcast %100 : vector<8x1xf32> to vector<8x8xf32>
    %102 = arith.subf %98, %101 : vector<8x8xf32>
    %103 = math.exp %102 : vector<8x8xf32>
    %cst_28 = arith.constant dense<0.000000e+00> : vector<8xf32>
    %104 = vector.multi_reduction <add>, %103, %cst_28 [1] : vector<8x8xf32> to vector<8xf32>
    %105 = vector.shape_cast %104 : vector<8xf32> to vector<8x1xf32>
    %106 = tpu.reciprocal %105 {approx = true} : vector<8x1xf32> -> vector<8x1xf32>
    %107 = vector.broadcast %106 : vector<8x1xf32> to vector<8x8xf32>
    %108 = arith.mulf %103, %107 : vector<8x8xf32>
    %cst_29 = arith.constant dense<0.000000e+00> : vector<8x8xf32>
    %109 = tpu.matmul %108, %94, %cst_29 {dimension_numbers = #tpu.dot_dimension_numbers<[1], [0], [0], [1], [0, 0, 1, 1], [], []>} : vector<8x8xf32>, vector<8x8xf32>, vector<8x8xf32> -> vector<8x8xf32>
    %110 = vector.extract_strided_slice %8 {offsets = [8, 8], sizes = [8, 8], strides = [1, 1]} : vector<16x32xf32> to vector<8x8xf32>
    %111 = vector.extract_strided_slice %9 {offsets = [8, 8], sizes = [8, 8], strides = [1, 1]} : vector<16x32xf32> to vector<8x8xf32>
    %112 = vector.extract_strided_slice %10 {offsets = [8, 8], sizes = [8, 8], strides = [1, 1]} : vector<16x32xf32> to vector<8x8xf32>
    %113 = tpu.transpose %111, [1, 0] : vector<8x8xf32> -> vector<8x8xf32>
    %cst_30 = arith.constant dense<0.000000e+00> : vector<8x8xf32>
    %114 = tpu.matmul %110, %113, %cst_30 {dimension_numbers = #tpu.dot_dimension_numbers<[1], [0], [0], [1], [0, 0, 1, 1], [], []>} : vector<8x8xf32>, vector<8x8xf32>, vector<8x8xf32> -> vector<8x8xf32>
    %115 = vector.broadcast %91 : vector<1x8xf32> to vector<8x8xf32>
    %116 = arith.subf %114, %115 : vector<8x8xf32>
    %cst_31 = arith.constant dense<0xFF800000> : vector<8xf32>
    %117 = vector.multi_reduction <maximumf>, %116, %cst_31 [1] : vector<8x8xf32> to vector<8xf32>
    %118 = vector.shape_cast %117 : vector<8xf32> to vector<8x1xf32>
    %119 = vector.broadcast %118 : vector<8x1xf32> to vector<8x8xf32>
    %120 = arith.subf %116, %119 : vector<8x8xf32>
    %121 = math.exp %120 : vector<8x8xf32>
    %cst_32 = arith.constant dense<0.000000e+00> : vector<8xf32>
    %122 = vector.multi_reduction <add>, %121, %cst_32 [1] : vector<8x8xf32> to vector<8xf32>
    %123 = vector.shape_cast %122 : vector<8xf32> to vector<8x1xf32>
    %124 = tpu.reciprocal %123 {approx = true} : vector<8x1xf32> -> vector<8x1xf32>
    %125 = vector.broadcast %124 : vector<8x1xf32> to vector<8x8xf32>
    %126 = arith.mulf %121, %125 : vector<8x8xf32>
    %cst_33 = arith.constant dense<0.000000e+00> : vector<8x8xf32>
    %127 = tpu.matmul %126, %112, %cst_33 {dimension_numbers = #tpu.dot_dimension_numbers<[1], [0], [0], [1], [0, 0, 1, 1], [], []>} : vector<8x8xf32>, vector<8x8xf32>, vector<8x8xf32> -> vector<8x8xf32>
    %128 = vector.extract_strided_slice %8 {offsets = [8, 16], sizes = [8, 8], strides = [1, 1]} : vector<16x32xf32> to vector<8x8xf32>
    %129 = vector.extract_strided_slice %9 {offsets = [8, 16], sizes = [8, 8], strides = [1, 1]} : vector<16x32xf32> to vector<8x8xf32>
    %130 = vector.extract_strided_slice %10 {offsets = [8, 16], sizes = [8, 8], strides = [1, 1]} : vector<16x32xf32> to vector<8x8xf32>
    %131 = tpu.transpose %129, [1, 0] : vector<8x8xf32> -> vector<8x8xf32>
    %cst_34 = arith.constant dense<0.000000e+00> : vector<8x8xf32>
    %132 = tpu.matmul %128, %131, %cst_34 {dimension_numbers = #tpu.dot_dimension_numbers<[1], [0], [0], [1], [0, 0, 1, 1], [], []>} : vector<8x8xf32>, vector<8x8xf32>, vector<8x8xf32> -> vector<8x8xf32>
    %133 = vector.broadcast %91 : vector<1x8xf32> to vector<8x8xf32>
    %134 = arith.subf %132, %133 : vector<8x8xf32>
    %cst_35 = arith.constant dense<0xFF800000> : vector<8xf32>
    %135 = vector.multi_reduction <maximumf>, %134, %cst_35 [1] : vector<8x8xf32> to vector<8xf32>
    %136 = vector.shape_cast %135 : vector<8xf32> to vector<8x1xf32>
    %137 = vector.broadcast %136 : vector<8x1xf32> to vector<8x8xf32>
    %138 = arith.subf %134, %137 : vector<8x8xf32>
    %139 = math.exp %138 : vector<8x8xf32>
    %cst_36 = arith.constant dense<0.000000e+00> : vector<8xf32>
    %140 = vector.multi_reduction <add>, %139, %cst_36 [1] : vector<8x8xf32> to vector<8xf32>
    %141 = vector.shape_cast %140 : vector<8xf32> to vector<8x1xf32>
    %142 = tpu.reciprocal %141 {approx = true} : vector<8x1xf32> -> vector<8x1xf32>
    %143 = vector.broadcast %142 : vector<8x1xf32> to vector<8x8xf32>
    %144 = arith.mulf %139, %143 : vector<8x8xf32>
    %cst_37 = arith.constant dense<0.000000e+00> : vector<8x8xf32>
    %145 = tpu.matmul %144, %130, %cst_37 {dimension_numbers = #tpu.dot_dimension_numbers<[1], [0], [0], [1], [0, 0, 1, 1], [], []>} : vector<8x8xf32>, vector<8x8xf32>, vector<8x8xf32> -> vector<8x8xf32>
    %146 = vector.extract_strided_slice %8 {offsets = [8, 24], sizes = [8, 8], strides = [1, 1]} : vector<16x32xf32> to vector<8x8xf32>
    %147 = vector.extract_strided_slice %9 {offsets = [8, 24], sizes = [8, 8], strides = [1, 1]} : vector<16x32xf32> to vector<8x8xf32>
    %148 = vector.extract_strided_slice %10 {offsets = [8, 24], sizes = [8, 8], strides = [1, 1]} : vector<16x32xf32> to vector<8x8xf32>
    %149 = tpu.transpose %147, [1, 0] : vector<8x8xf32> -> vector<8x8xf32>
    %cst_38 = arith.constant dense<0.000000e+00> : vector<8x8xf32>
    %150 = tpu.matmul %146, %149, %cst_38 {dimension_numbers = #tpu.dot_dimension_numbers<[1], [0], [0], [1], [0, 0, 1, 1], [], []>} : vector<8x8xf32>, vector<8x8xf32>, vector<8x8xf32> -> vector<8x8xf32>
    %151 = vector.broadcast %91 : vector<1x8xf32> to vector<8x8xf32>
    %152 = arith.subf %150, %151 : vector<8x8xf32>
    %cst_39 = arith.constant dense<0xFF800000> : vector<8xf32>
    %153 = vector.multi_reduction <maximumf>, %152, %cst_39 [1] : vector<8x8xf32> to vector<8xf32>
    %154 = vector.shape_cast %153 : vector<8xf32> to vector<8x1xf32>
    %155 = vector.broadcast %154 : vector<8x1xf32> to vector<8x8xf32>
    %156 = arith.subf %152, %155 : vector<8x8xf32>
    %157 = math.exp %156 : vector<8x8xf32>
    %cst_40 = arith.constant dense<0.000000e+00> : vector<8xf32>
    %158 = vector.multi_reduction <add>, %157, %cst_40 [1] : vector<8x8xf32> to vector<8xf32>
    %159 = vector.shape_cast %158 : vector<8xf32> to vector<8x1xf32>
    %160 = tpu.reciprocal %159 {approx = true} : vector<8x1xf32> -> vector<8x1xf32>
    %161 = vector.broadcast %160 : vector<8x1xf32> to vector<8x8xf32>
    %162 = arith.mulf %157, %161 : vector<8x8xf32>
    %cst_41 = arith.constant dense<0.000000e+00> : vector<8x8xf32>
    %163 = tpu.matmul %162, %148, %cst_41 {dimension_numbers = #tpu.dot_dimension_numbers<[1], [0], [0], [1], [0, 0, 1, 1], [], []>} : vector<8x8xf32>, vector<8x8xf32>, vector<8x8xf32> -> vector<8x8xf32>
    %164 = tpu.concatenate %109, %127, %145, %163 in 1 : vector<8x8xf32>, vector<8x8xf32>, vector<8x8xf32>, vector<8x8xf32> -> vector<8x32xf32>
    %165 = tpu.concatenate %108, %126, %144, %162 in 1 : vector<8x8xf32>, vector<8x8xf32>, vector<8x8xf32>, vector<8x8xf32> -> vector<8x32xf32>
    %166 = tpu.concatenate %89, %164 in 0 : vector<8x32xf32>, vector<8x32xf32> -> vector<16x32xf32>
    %c0_42 = arith.constant 0 : index
    %c0_43 = arith.constant 0 : index
    %167 = vector.load %arg5[%c0_42, %c0_43] : memref<16x32xf32, #tpu.memory_space<vmem>>, vector<16x32xf32>
    tpu.vector_store %arg5[%c0_42, %c0_43], %166 {strides = array<i32>} : memref<16x32xf32, #tpu.memory_space<vmem>>, vector<16x32xf32>,
    %168 = tpu.concatenate %90, %165 in 0 : vector<8x32xf32>, vector<8x32xf32> -> vector<16x32xf32>
    %c0_44 = arith.constant 0 : index
    %c0_45 = arith.constant 0 : index
    %169 = vector.load %arg6[%c0_44, %c0_45] : memref<16x32xf32, #tpu.memory_space<vmem>>, vector<16x32xf32>
    tpu.vector_store %arg6[%c0_44, %c0_45], %168 {strides = array<i32>} : memref<16x32xf32, #tpu.memory_space<vmem>>, vector<16x32xf32>,
    return
  }
  func.func @transform_0(%arg0: i32) -> (i32, i32) {
    %c0_i32 = arith.constant 0 : i32
    %c0_i32_0 = arith.constant 0 : i32
    %c0_i32_1 = arith.constant 0 : i32
    return %c0_i32, %c0_i32_0 : i32, i32
  }
  func.func @transform_1(%arg0: i32) -> (i32, i32) {
    %c0_i32 = arith.constant 0 : i32
    %c0_i32_0 = arith.constant 0 : i32
    %c0_i32_1 = arith.constant 0 : i32
    return %c0_i32, %c0_i32_0 : i32, i32
  }
  func.func @transform_2(%arg0: i32) -> (i32, i32) {
    %c0_i32 = arith.constant 0 : i32
    %c0_i32_0 = arith.constant 0 : i32
    %c0_i32_1 = arith.constant 0 : i32
    return %c0_i32, %c0_i32_0 : i32, i32
  }
  func.func @transform_3(%arg0: i32) -> (i32, i32) {
    %c0_i32 = arith.constant 0 : i32
    %c0_i32_0 = arith.constant 0 : i32
    %c0_i32_1 = arith.constant 0 : i32
    return %c0_i32, %c0_i32_0 : i32, i32
  }
  func.func @transform_4(%arg0: i32) -> (i32, i32) {
    %c0_i32 = arith.constant 0 : i32
    %c0_i32_0 = arith.constant 0 : i32
    %c0_i32_1 = arith.constant 0 : i32
    return %c0_i32, %c0_i32_0 : i32, i32
  }
  func.func @transform_5(%arg0: i32) -> (i32, i32) {
    %c0_i32 = arith.constant 0 : i32
    %c0_i32_0 = arith.constant 0 : i32
    %c0_i32_1 = arith.constant 0 : i32
    return %c0_i32, %c0_i32_0 : i32, i32
  }
}

</mosaic_0001>

<llo_original>
// kernel: tpu_custom_call.1
$region0: #{tpu_custom_call.1}
  #allocation0 [shape = 'u32[]', space=smem, size = 0x4, offset = 0x4, fixed_abs, tag = 'smem constant byte address 0x4 - core index']
  #allocation1 [shape = 'u32[144,128]{1,0:T(1,128)}', space=vmem, size = 0x12000, scoped, tag = 'internal scratch']
  %s0 = inlined_call_operand.hbm [shape: f32[16,32], index: 0, kind: input, shape index: {}]
  %s1 = inlined_call_operand.vmem [shape: f32[2,8], index: 1, kind: input, shape index: {}]
  %s2 = inlined_call_operand.hbm [shape: f32[32,96], index: 2, kind: input, shape index: {}]
  %s3 = inlined_call_operand.vmem [shape: f32[1,96], index: 3, kind: input, shape index: {}]
  %s4 = inlined_call_operand.hbm [shape: f32[16,32], index: 4, kind: output, shape index: {0}]
  %s5 = inlined_call_operand.hbm [shape: f32[16,32], index: 5, kind: output, shape index: {1}]
  %6 = xla_tuple %s4, %s5
  %s7 = sld [smem:[#allocation0]]
  $region42: #{tpu_custom_call.1} parent=0
    _
  %s9 = ssub.s32 1, %s7
  %s10 = scalar_select 0, %s9, %s7
  $region1: #{tpu_custom_call.1} parent=0
    #allocation2 [shape = 'u8[8192]{0}', space=vmem, size = 0x2000, scoped, tag = 'input window, operand 0, single buffered']
    #allocation3 [shape = 's32[1]{0}', space=sflag, size = 0x4, scoped, tag = 'scoped memory for tpu_custom_call.1']
    #allocation4 [shape = 's32[1]{0}', space=sflag, size = 0x4, scoped, tag = 'scoped memory for tpu_custom_call.1']
    #allocation5 [shape = 'u8[16384]{0}', space=vmem, size = 0x4000, scoped, tag = 'input window, operand 2, single buffered']
    #allocation6 [shape = 's32[1]{0}', space=sflag, size = 0x4, scoped, tag = 'scoped memory for tpu_custom_call.1']
    #allocation7 [shape = 'u8[8192]{0}', space=vmem, size = 0x2000, scoped, tag = 'output window, operand 0, single buffered']
    #allocation8 [shape = 'u8[8192]{0}', space=vmem, size = 0x2000, scoped, tag = 'output window, operand 1, single buffered']
    #allocation9 [shape = 's32[1]{0}', space=sflag, size = 0x4, scoped, tag = 'scoped memory for tpu_custom_call.1']
    %11 = vsyncpa [#allocation3], 0
    %12 = vsyncpa [#allocation6], 0
    %13 = vsyncpa [#allocation4], 0
    %14 = vsyncpa [#allocation9], 0
    // Predicated region
    $region2: #{tpu_custom_call.1} parent=1 // pred_check
      _
    $region3: #{tpu_custom_call.1} parent=1 // pred_check_branch
      %16 = sbr.rel (0) target = $region5
    $region4: #{tpu_custom_call.1} parent=1 // pred_region
      %s18 = ssub.s32 256, 256
      %19 = vsyncadd [#allocation3], %s18
      %s20 = sshll.u32 [#allocation2], 4
      %s21 = int_to_ptr.vmem [resolvable:$true] %s20
      %26 = dma.hbm_to_vmem [thread:$0]  %s0, 256, %s21, [#allocation3], 128, 128, 8
    $region5: #{tpu_custom_call.1} parent=1 // pred_fallthru
      _
    // Predicated region
    $region6: #{tpu_custom_call.1} parent=1 // pred_check
      _
    $region7: #{tpu_custom_call.1} parent=1 // pred_check_branch
      %28 = sbr.rel (0) target = $region9
    $region8: #{tpu_custom_call.1} parent=1 // pred_region
      _
    $region9: #{tpu_custom_call.1} parent=1 // pred_fallthru
      _
    // Predicated region
    $region10: #{tpu_custom_call.1} parent=1 // pred_check
      _
    $region11: #{tpu_custom_call.1} parent=1 // pred_check_branch
      %30 = sbr.rel (0) target = $region13
    $region12: #{tpu_custom_call.1} parent=1 // pred_region
      %s32 = ssub.s32 512, 512
      %33 = vsyncadd [#allocation6], %s32
      %s34 = sshll.u32 [#allocation5], 4
      %s35 = int_to_ptr.vmem [resolvable:$true] %s34
      %40 = dma.hbm_to_vmem [thread:$0]  %s2, 512, %s35, [#allocation6], 128, 128, 8
    $region13: #{tpu_custom_call.1} parent=1 // pred_fallthru
      _
    // Predicated region
    $region14: #{tpu_custom_call.1} parent=1 // pred_check
      _
    $region15: #{tpu_custom_call.1} parent=1 // pred_check_branch
      %42 = sbr.rel (0) target = $region17
    $region16: #{tpu_custom_call.1} parent=1 // pred_region
      _
    $region17: #{tpu_custom_call.1} parent=1 // pred_fallthru
      _
    // Predicated region
    $region18: #{tpu_custom_call.1} parent=1 // pred_check
      _
    $region19: #{tpu_custom_call.1} parent=1 // pred_check_branch
      %44 = sbr.rel (0) target = $region21
    $region20: #{tpu_custom_call.1} parent=1 // pred_region
      %45 = dma.done [#allocation3], 256
    $region21: #{tpu_custom_call.1} parent=1 // pred_fallthru
      _
    // Predicated region
    $region22: #{tpu_custom_call.1} parent=1 // pred_check
      _
    $region23: #{tpu_custom_call.1} parent=1 // pred_check_branch
      %47 = sbr.rel (0) target = $region25
    $region24: #{tpu_custom_call.1} parent=1 // pred_region
      %48 = dma.done [#allocation6], 512
    $region25: #{tpu_custom_call.1} parent=1 // pred_fallthru
      _
    %v49 = vld [vmem:[#allocation2] sm:$0xff]
    %v50 = vld [vmem:[#allocation2 + $0x8] sm:$0xff]
    %v51 = vld [vmem:[#allocation5] sm:$0xff]
    %v52 = vld [vmem:[#allocation5 + $0x8] sm:$0xff]
    %v53 = vld [vmem:[#allocation5 + $0x10] sm:$0xff]
    %v54 = vld [vmem:[#allocation5 + $0x18] sm:$0xff]
    %v55 = vld [vmem:[%s3] sm:$0x1]
    %v57 = vlaneseq
    %v58 = vshrl.u32 %v57, 7
    %v59 = vsub.s32 0, %v58
    %v60 = vrot.slane %v55, %v59
    %vm62 = vcmask 261120
    %v64 = vsel %vm62, %v49, 0
    %v67 = vsel %vm62, %v50, 0
    %69 = vmatprep.subr.mxu0 0.0
    %70 = vmatpush1.msra.mxu0 %v51
    %71 = vmatprep.subr.mxu0 0.0
    %72 = vmatpush1.msra.mxu0 %v52
    %73 = vmatprep.subr.mxu0 0.0
    %74 = vmatpush1.msra.mxu0 %v53
    %75 = vmatprep.subr.mxu0 0.0
    %76 = vmatpush1.msra.mxu0 %v54
    %77 = vmatprep.subr.mxu0 0.0
    %78 = vmatpush1.msra.mxu0 0.0
    %79 = vmatprep.subr.mxu0 0.0
    %80 = vmatpush1.msra.mxu0 0.0
    %81 = vmatprep.subr.mxu0 0.0
    %82 = vmatpush1.msra.mxu0 0.0
    %83 = vmatprep.subr.mxu0 0.0
    %84 = vmatpush1.msra.mxu0 0.0
    %85 = vmatprep.subr.mxu0 0.0
    %86 = vmatpush1.msra.mxu0 0.0
    %87 = vmatprep.subr.mxu0 0.0
    %88 = vmatpush1.msra.mxu0 0.0
    %89 = vmatprep.subr.mxu0 0.0
    %90 = vmatpush1.msra.mxu0 0.0
    %91 = vmatprep.subr.mxu0 0.0
    %92 = vmatpush1.msra.mxu0 0.0
    %93 = vmatprep.subr.mxu0 0.0
    %94 = vmatpush1.msra.mxu0 0.0
    %95 = vmatprep.subr.mxu0 0.0
    %96 = vmatpush1.msra.mxu0 0.0
    %97 = vmatprep.subr.mxu0 0.0
    %98 = vmatpush1.msra.mxu0 0.0
    %99 = vmatprep.subr.mxu0 0.0
    %100 = vmatpush1.msra.mxu0 0.0
    %101 = vmatprep.subr.mxu0 0.0
    %102 = vmatpush1.msra.mxu0 0.0
    %103 = vmatprep.subr.mxu0 0.0
    %104 = vmatpush1.msra.mxu0 0.0
    %105 = vmatprep.subr.mxu0 0.0
    %106 = vmatpush1.msra.mxu0 0.0
    %107 = vmatprep.subr.mxu0 0.0
    %108 = vmatpush1.msra.mxu0 0.0
    %109 = vmatprep.subr.mxu0 0.0
    %110 = vmatpush1.msra.mxu0 0.0
    %111 = vmatprep.subr.mxu0 0.0
    %112 = vmatpush1.msra.mxu0 0.0
    %113 = vmatprep.subr.mxu0 0.0
    %114 = vmatpush1.msra.mxu0 0.0
    %115 = vmatprep.subr.mxu0 0.0
    %116 = vmatpush1.msra.mxu0 0.0
    %117 = vmatprep.subr.mxu0 0.0
    %118 = vmatpush1.msra.mxu0 0.0
    %119 = vmatprep.subr.mxu0 0.0
    %120 = vmatpush1.msra.mxu0 0.0
    %121 = vmatprep.subr.mxu0 0.0
    %122 = vmatpush1.msra.mxu0 0.0
    %123 = vmatprep.subr.mxu0 0.0
    %124 = vmatpush1.msra.mxu0 0.0
    %125 = vmatprep.subr.mxu0 0.0
    %126 = vmatpush1.msra.mxu0 0.0
    %127 = vmatprep.subr.mxu0 0.0
    %128 = vmatpush1.msra.mxu0 0.0
    %129 = vmatprep.subr.mxu0 0.0
    %130 = vmatpush1.msra.mxu0 0.0
    %131 = vmatprep.subr.mxu0 0.0
    %132 = vmatpush1.msra.mxu0 0.0
    %133 = vmatprep.mubr.f32.mxu0 0.0
    %134 = vmatmul.mubr.f32.gmra.mrb[0].mxu0 %v64
    %v135 = vpop.f32.mrb[0].mxu0
    %v136 = vadd.f32 %v60, %v135
    %v137 = vpop.f32.mrb[0].mxu0
    %138 = vmatprep.mubr.f32.mxu0 0.0
    %139 = vmatmul.mubr.f32.gmra.mrb[0].mxu0 %v67
    %v140 = vpop.f32.mrb[0].mxu0
    %v141 = vadd.f32 %v60, %v140
    %v142 = vpop.f32.mrb[0].mxu0
    %143 = vdwg.mxu0
    %v144 = vmul.f32 %v136, 0.35355338
    %v145 = vmul.f32 %v141, 0.35355338
    %v146 = vld [vmem:[%s1] sm:$0x3]
    %v147 = vsub.f32 1.0, %v146
    %v148 = vmul.f32 %v147, 10000.0
    %150 = vrot.lane.b32.xlu0 %v136, 96
    %v151 = vpop.permute.xlu0 %150
    %vm152 = vcmask 64512
    %v154 = vsel %vm152, %v144, 0
    %v156 = vsel %vm152, %v151, 0
    %158 = vmatprep.subr.mxu0 0.0
    %159 = vmatpush1.xpose.msra.mxu0 %v156
    %160 = vmatprep.subr.mxu0 0.0
    %161 = vmatpush1.xpose.msra.mxu0 0.0
    %162 = vmatprep.subr.mxu0 0.0
    %163 = vmatpush1.xpose.msra.mxu0 0.0
    %164 = vmatprep.subr.mxu0 0.0
    %165 = vmatpush1.xpose.msra.mxu0 0.0
    %166 = vmatprep.subr.mxu0 0.0
    %167 = vmatpush1.xpose.msra.mxu0 0.0
    %168 = vmatprep.subr.mxu0 0.0
    %169 = vmatpush1.xpose.msra.mxu0 0.0
    %170 = vmatprep.subr.mxu0 0.0
    %171 = vmatpush1.xpose.msra.mxu0 0.0
    %172 = vmatprep.subr.mxu0 0.0
    %173 = vmatpush1.xpose.msra.mxu0 0.0
    %174 = vmatprep.subr.mxu0 0.0
    %175 = vmatpush1.xpose.msra.mxu0 0.0
    %176 = vmatprep.subr.mxu0 0.0
    %177 = vmatpush1.xpose.msra.mxu0 0.0
    %178 = vmatprep.subr.mxu0 0.0
    %179 = vmatpush1.xpose.msra.mxu0 0.0
    %180 = vmatprep.subr.mxu0 0.0
    %181 = vmatpush1.xpose.msra.mxu0 0.0
    %182 = vmatprep.subr.mxu0 0.0
    %183 = vmatpush1.xpose.msra.mxu0 0.0
    %184 = vmatprep.subr.mxu0 0.0
    %185 = vmatpush1.xpose.msra.mxu0 0.0
    %186 = vmatprep.subr.mxu0 0.0
    %187 = vmatpush1.xpose.msra.mxu0 0.0
    %188 = vmatprep.subr.mxu0 0.0
    %189 = vmatpush1.xpose.msra.mxu0 0.0
    %190 = vmatprep.subr.mxu0 0.0
    %191 = vmatpush1.xpose.msra.mxu0 0.0
    %192 = vmatprep.subr.mxu0 0.0
    %193 = vmatpush1.xpose.msra.mxu0 0.0
    %194 = vmatprep.subr.mxu0 0.0
    %195 = vmatpush1.xpose.msra.mxu0 0.0
    %196 = vmatprep.subr.mxu0 0.0
    %197 = vmatpush1.xpose.msra.mxu0 0.0
    %198 = vmatprep.subr.mxu0 0.0
    %199 = vmatpush1.xpose.msra.mxu0 0.0
    %200 = vmatprep.subr.mxu0 0.0
    %201 = vmatpush1.xpose.msra.mxu0 0.0
    %202 = vmatprep.subr.mxu0 0.0
    %203 = vmatpush1.xpose.msra.mxu0 0.0
    %204 = vmatprep.subr.mxu0 0.0
    %205 = vmatpush1.xpose.msra.mxu0 0.0
    %206 = vmatprep.subr.mxu0 0.0
    %207 = vmatpush1.xpose.msra.mxu0 0.0
    %208 = vmatprep.subr.mxu0 0.0
    %209 = vmatpush1.xpose.msra.mxu0 0.0
    %210 = vmatprep.subr.mxu0 0.0
    %211 = vmatpush1.xpose.msra.mxu0 0.0
    %212 = vmatprep.subr.mxu0 0.0
    %213 = vmatpush1.xpose.msra.mxu0 0.0
    %214 = vmatprep.subr.mxu0 0.0
    %215 = vmatpush1.xpose.msra.mxu0 0.0
    %216 = vmatprep.subr.mxu0 0.0
    %217 = vmatpush1.xpose.msra.mxu0 0.0
    %218 = vmatprep.subr.mxu0 0.0
    %219 = vmatpush1.xpose.msra.mxu0 0.0
    %220 = vmatprep.subr.mxu0 0.0
    %221 = vmatpush1.xpose.msra.mxu0 0.0
    %222 = vmatprep.mubr.f32.mxu0 0.0
    %223 = vmatmul.mubr.f32.gmra.mrb[0].mxu0 %v154
    %v224 = vpop.f32.mrb[0].mxu0
    %v225 = vadd.f32 0.0, %v224
    %v226 = vpop.f32.mrb[0].mxu0
    %227 = vdwg.mxu0
    %v228 = vlaneseq
    %v229 = vshrl.u32 %v228, 7
    %v230 = vsub.s32 0, %v229
    %v231 = vrot.slane %v148, %v230
    %v232 = vsub.f32 %v225, %v231
    %v233 = vsel %vm152, %v232, -inf
    %234 = vmax.xlane.f32.xlu0 %v233
    %v235 = vpop.xlane.xlu0 %234
    %v236 = vsub.f32 %v232, %v235
    %v237 = vmul.f32 %v236, 1.442695
    %v238 = vpow.pop %v237
    %v239 = vsel %vm152, %v238, 0.0
    %240 = vadd.xlane.f32.xlu0 %v239
    %v241 = vpop.xlane.xlu0 %240
    %v242 = vrcp.pop %v241
    %v243 = vmul.f32 %v238, %v242
    %244 = vrot.lane.b32.xlu0 %v136, 64
    %v245 = vpop.permute.xlu0 %244
    %v248 = vsel %vm152, %v243, 0
    %250 = vmatprep.subr.mxu0 0.0
    %251 = vmatpush1.msra.mxu0 %v245
    %252 = vmatprep.subr.mxu0 0.0
    %253 = vmatpush1.msra.mxu0 0.0
    %254 = vmatprep.subr.mxu0 0.0
    %255 = vmatpush1.msra.mxu0 0.0
    %256 = vmatprep.subr.mxu0 0.0
    %257 = vmatpush1.msra.mxu0 0.0
    %258 = vmatprep.subr.mxu0 0.0
    %259 = vmatpush1.msra.mxu0 0.0
    %260 = vmatprep.subr.mxu0 0.0
    %261 = vmatpush1.msra.mxu0 0.0
    %262 = vmatprep.subr.mxu0 0.0
    %263 = vmatpush1.msra.mxu0 0.0
    %264 = vmatprep.subr.mxu0 0.0
    %265 = vmatpush1.msra.mxu0 0.0
    %266 = vmatprep.subr.mxu0 0.0
    %267 = vmatpush1.msra.mxu0 0.0
    %268 = vmatprep.subr.mxu0 0.0
    %269 = vmatpush1.msra.mxu0 0.0
    %270 = vmatprep.subr.mxu0 0.0
    %271 = vmatpush1.msra.mxu0 0.0
    %272 = vmatprep.subr.mxu0 0.0
    %273 = vmatpush1.msra.mxu0 0.0
    %274 = vmatprep.subr.mxu0 0.0
    %275 = vmatpush1.msra.mxu0 0.0
    %276 = vmatprep.subr.mxu0 0.0
    %277 = vmatpush1.msra.mxu0 0.0
    %278 = vmatprep.subr.mxu0 0.0
    %279 = vmatpush1.msra.mxu0 0.0
    %280 = vmatprep.subr.mxu0 0.0
    %281 = vmatpush1.msra.mxu0 0.0
    %282 = vmatprep.subr.mxu0 0.0
    %283 = vmatpush1.msra.mxu0 0.0
    %284 = vmatprep.subr.mxu0 0.0
    %285 = vmatpush1.msra.mxu0 0.0
    %286 = vmatprep.subr.mxu0 0.0
    %287 = vmatpush1.msra.mxu0 0.0
    %288 = vmatprep.subr.mxu0 0.0
    %289 = vmatpush1.msra.mxu0 0.0
    %290 = vmatprep.subr.mxu0 0.0
    %291 = vmatpush1.msra.mxu0 0.0
    %292 = vmatprep.subr.mxu0 0.0
    %293 = vmatpush1.msra.mxu0 0.0
    %294 = vmatprep.subr.mxu0 0.0
    %295 = vmatpush1.msra.mxu0 0.0
    %296 = vmatprep.subr.mxu0 0.0
    %297 = vmatpush1.msra.mxu0 0.0
    %298 = vmatprep.subr.mxu0 0.0
    %299 = vmatpush1.msra.mxu0 0.0
    %300 = vmatprep.subr.mxu0 0.0
    %301 = vmatpush1.msra.mxu0 0.0
    %302 = vmatprep.subr.mxu0 0.0
    %303 = vmatpush1.msra.mxu0 0.0
    %304 = vmatprep.subr.mxu0 0.0
    %305 = vmatpush1.msra.mxu0 0.0
    %306 = vmatprep.subr.mxu0 0.0
    %307 = vmatpush1.msra.mxu0 0.0
    %308 = vmatprep.subr.mxu0 0.0
    %309 = vmatpush1.msra.mxu0 0.0
    %310 = vmatprep.subr.mxu0 0.0
    %311 = vmatpush1.msra.mxu0 0.0
    %312 = vmatprep.subr.mxu0 0.0
    %313 = vmatpush1.msra.mxu0 0.0
    %314 = vmatprep.mubr.f32.mxu0 0.0
    %315 = vmatmul.mubr.f32.gmra.mrb[0].mxu0 %v248
    %v316 = vpop.f32.mrb[0].mxu0
    %v317 = vadd.f32 0.0, %v316
    %v318 = vpop.f32.mrb[0].mxu0
    %319 = vdwg.mxu0
    %320 = vrot.lane.b32.xlu0 %v144, 120
    %v321 = vpop.permute.xlu0 %320
    %322 = vrot.lane.b32.xlu0 %v136, 88
    %v323 = vpop.permute.xlu0 %322
    %v324 = vsel %vm152, %v321, 0
    %v326 = vsel %vm152, %v323, 0
    %328 = vmatprep.subr.mxu0 0.0
    %329 = vmatpush1.xpose.msra.mxu0 %v326
    %330 = vmatprep.subr.mxu0 0.0
    %331 = vmatpush1.xpose.msra.mxu0 0.0
    %332 = vmatprep.subr.mxu0 0.0
    %333 = vmatpush1.xpose.msra.mxu0 0.0
    %334 = vmatprep.subr.mxu0 0.0
    %335 = vmatpush1.xpose.msra.mxu0 0.0
    %336 = vmatprep.subr.mxu0 0.0
    %337 = vmatpush1.xpose.msra.mxu0 0.0
    %338 = vmatprep.subr.mxu0 0.0
    %339 = vmatpush1.xpose.msra.mxu0 0.0
    %340 = vmatprep.subr.mxu0 0.0
    %341 = vmatpush1.xpose.msra.mxu0 0.0
    %342 = vmatprep.subr.mxu0 0.0
    %343 = vmatpush1.xpose.msra.mxu0 0.0
    %344 = vmatprep.subr.mxu0 0.0
    %345 = vmatpush1.xpose.msra.mxu0 0.0
    %346 = vmatprep.subr.mxu0 0.0
    %347 = vmatpush1.xpose.msra.mxu0 0.0
    %348 = vmatprep.subr.mxu0 0.0
    %349 = vmatpush1.xpose.msra.mxu0 0.0
    %350 = vmatprep.subr.mxu0 0.0
    %351 = vmatpush1.xpose.msra.mxu0 0.0
    %352 = vmatprep.subr.mxu0 0.0
    %353 = vmatpush1.xpose.msra.mxu0 0.0
    %354 = vmatprep.subr.mxu0 0.0
    %355 = vmatpush1.xpose.msra.mxu0 0.0
    %356 = vmatprep.subr.mxu0 0.0
    %357 = vmatpush1.xpose.msra.mxu0 0.0
    %358 = vmatprep.subr.mxu0 0.0
    %359 = vmatpush1.xpose.msra.mxu0 0.0
    %360 = vmatprep.subr.mxu0 0.0
    %361 = vmatpush1.xpose.msra.mxu0 0.0
    %362 = vmatprep.subr.mxu0 0.0
    %363 = vmatpush1.xpose.msra.mxu0 0.0
    %364 = vmatprep.subr.mxu0 0.0
    %365 = vmatpush1.xpose.msra.mxu0 0.0
    %366 = vmatprep.subr.mxu0 0.0
    %367 = vmatpush1.xpose.msra.mxu0 0.0
    %368 = vmatprep.subr.mxu0 0.0
    %369 = vmatpush1.xpose.msra.mxu0 0.0
    %370 = vmatprep.subr.mxu0 0.0
    %371 = vmatpush1.xpose.msra.mxu0 0.0
    %372 = vmatprep.subr.mxu0 0.0
    %373 = vmatpush1.xpose.msra.mxu0 0.0
    %374 = vmatprep.subr.mxu0 0.0
    %375 = vmatpush1.xpose.msra.mxu0 0.0
    %376 = vmatprep.subr.mxu0 0.0
    %377 = vmatpush1.xpose.msra.mxu0 0.0
    %378 = vmatprep.subr.mxu0 0.0
    %379 = vmatpush1.xpose.msra.mxu0 0.0
    %380 = vmatprep.subr.mxu0 0.0
    %381 = vmatpush1.xpose.msra.mxu0 0.0
    %382 = vmatprep.subr.mxu0 0.0
    %383 = vmatpush1.xpose.msra.mxu0 0.0
    %384 = vmatprep.subr.mxu0 0.0
    %385 = vmatpush1.xpose.msra.mxu0 0.0
    %386 = vmatprep.subr.mxu0 0.0
    %387 = vmatpush1.xpose.msra.mxu0 0.0
    %388 = vmatprep.subr.mxu0 0.0
    %389 = vmatpush1.xpose.msra.mxu0 0.0
    %390 = vmatprep.subr.mxu0 0.0
    %391 = vmatpush1.xpose.msra.mxu0 0.0
    %392 = vmatprep.mubr.f32.mxu0 0.0
    %393 = vmatmul.mubr.f32.gmra.mrb[0].mxu0 %v324
    %v394 = vpop.f32.mrb[0].mxu0
    %v395 = vadd.f32 0.0, %v394
    %v396 = vpop.f32.mrb[0].mxu0
    %397 = vdwg.mxu0
    %v398 = vsub.f32 %v395, %v231
    %v399 = vsel %vm152, %v398, -inf
    %400 = vmax.xlane.f32.xlu0 %v399
    %v401 = vpop.xlane.xlu0 %400
    %v402 = vsub.f32 %v398, %v401
    %v403 = vmul.f32 %v402, 1.442695
    %v404 = vpow.pop %v403
    %v405 = vsel %vm152, %v404, 0.0
    %406 = vadd.xlane.f32.xlu0 %v405
    %v407 = vpop.xlane.xlu0 %406
    %v408 = vrcp.pop %v407
    %v409 = vmul.f32 %v404, %v408
    %410 = vrot.lane.b32.xlu0 %v136, 56
    %v411 = vpop.permute.xlu0 %410
    %v414 = vsel %vm152, %v409, 0
    %416 = vmatprep.subr.mxu0 0.0
    %417 = vmatpush1.msra.mxu0 %v411
    %418 = vmatprep.subr.mxu0 0.0
    %419 = vmatpush1.msra.mxu0 0.0
    %420 = vmatprep.subr.mxu0 0.0
    %421 = vmatpush1.msra.mxu0 0.0
    %422 = vmatprep.subr.mxu0 0.0
    %423 = vmatpush1.msra.mxu0 0.0
    %424 = vmatprep.subr.mxu0 0.0
    %425 = vmatpush1.msra.mxu0 0.0
    %426 = vmatprep.subr.mxu0 0.0
    %427 = vmatpush1.msra.mxu0 0.0
    %428 = vmatprep.subr.mxu0 0.0
    %429 = vmatpush1.msra.mxu0 0.0
    %430 = vmatprep.subr.mxu0 0.0
    %431 = vmatpush1.msra.mxu0 0.0
    %432 = vmatprep.subr.mxu0 0.0
    %433 = vmatpush1.msra.mxu0 0.0
    %434 = vmatprep.subr.mxu0 0.0
    %435 = vmatpush1.msra.mxu0 0.0
    %436 = vmatprep.subr.mxu0 0.0
    %437 = vmatpush1.msra.mxu0 0.0
    %438 = vmatprep.subr.mxu0 0.0
    %439 = vmatpush1.msra.mxu0 0.0
    %440 = vmatprep.subr.mxu0 0.0
    %441 = vmatpush1.msra.mxu0 0.0
    %442 = vmatprep.subr.mxu0 0.0
    %443 = vmatpush1.msra.mxu0 0.0
    %444 = vmatprep.subr.mxu0 0.0
    %445 = vmatpush1.msra.mxu0 0.0
    %446 = vmatprep.subr.mxu0 0.0
    %447 = vmatpush1.msra.mxu0 0.0
    %448 = vmatprep.subr.mxu0 0.0
    %449 = vmatpush1.msra.mxu0 0.0
    %450 = vmatprep.subr.mxu0 0.0
    %451 = vmatpush1.msra.mxu0 0.0
    %452 = vmatprep.subr.mxu0 0.0
    %453 = vmatpush1.msra.mxu0 0.0
    %454 = vmatprep.subr.mxu0 0.0
    %455 = vmatpush1.msra.mxu0 0.0
    %456 = vmatprep.subr.mxu0 0.0
    %457 = vmatpush1.msra.mxu0 0.0
    %458 = vmatprep.subr.mxu0 0.0
    %459 = vmatpush1.msra.mxu0 0.0
    %460 = vmatprep.subr.mxu0 0.0
    %461 = vmatpush1.msra.mxu0 0.0
    %462 = vmatprep.subr.mxu0 0.0
    %463 = vmatpush1.msra.mxu0 0.0
    %464 = vmatprep.subr.mxu0 0.0
    %465 = vmatpush1.msra.mxu0 0.0
    %466 = vmatprep.subr.mxu0 0.0
    %467 = vmatpush1.msra.mxu0 0.0
    %468 = vmatprep.subr.mxu0 0.0
    %469 = vmatpush1.msra.mxu0 0.0
    %470 = vmatprep.subr.mxu0 0.0
    %471 = vmatpush1.msra.mxu0 0.0
    %472 = vmatprep.subr.mxu0 0.0
    %473 = vmatpush1.msra.mxu0 0.0
    %474 = vmatprep.subr.mxu0 0.0
    %475 = vmatpush1.msra.mxu0 0.0
    %476 = vmatprep.subr.mxu0 0.0
    %477 = vmatpush1.msra.mxu0 0.0
    %478 = vmatprep.subr.mxu0 0.0
    %479 = vmatpush1.msra.mxu0 0.0
    %480 = vmatprep.mubr.f32.mxu0 0.0
    %481 = vmatmul.mubr.f32.gmra.mrb[0].mxu0 %v414
    %v482 = vpop.f32.mrb[0].mxu0
    %v483 = vadd.f32 0.0, %v482
    %v484 = vpop.f32.mrb[0].mxu0
    %485 = vdwg.mxu0
    %486 = vrot.lane.b32.xlu0 %v144, 112
    %v487 = vpop.permute.xlu0 %486
    %488 = vrot.lane.b32.xlu0 %v136, 80
    %v489 = vpop.permute.xlu0 %488
    %v490 = vsel %vm152, %v487, 0
    %v492 = vsel %vm152, %v489, 0
    %494 = vmatprep.subr.mxu0 0.0
    %495 = vmatpush1.xpose.msra.mxu0 %v492
    %496 = vmatprep.subr.mxu0 0.0
    %497 = vmatpush1.xpose.msra.mxu0 0.0
    %498 = vmatprep.subr.mxu0 0.0
    %499 = vmatpush1.xpose.msra.mxu0 0.0
    %500 = vmatprep.subr.mxu0 0.0
    %501 = vmatpush1.xpose.msra.mxu0 0.0
    %502 = vmatprep.subr.mxu0 0.0
    %503 = vmatpush1.xpose.msra.mxu0 0.0
    %504 = vmatprep.subr.mxu0 0.0
    %505 = vmatpush1.xpose.msra.mxu0 0.0
    %506 = vmatprep.subr.mxu0 0.0
    %507 = vmatpush1.xpose.msra.mxu0 0.0
    %508 = vmatprep.subr.mxu0 0.0
    %509 = vmatpush1.xpose.msra.mxu0 0.0
    %510 = vmatprep.subr.mxu0 0.0
    %511 = vmatpush1.xpose.msra.mxu0 0.0
    %512 = vmatprep.subr.mxu0 0.0
    %513 = vmatpush1.xpose.msra.mxu0 0.0
    %514 = vmatprep.subr.mxu0 0.0
    %515 = vmatpush1.xpose.msra.mxu0 0.0
    %516 = vmatprep.subr.mxu0 0.0
    %517 = vmatpush1.xpose.msra.mxu0 0.0
    %518 = vmatprep.subr.mxu0 0.0
    %519 = vmatpush1.xpose.msra.mxu0 0.0
    %520 = vmatprep.subr.mxu0 0.0
    %521 = vmatpush1.xpose.msra.mxu0 0.0
    %522 = vmatprep.subr.mxu0 0.0
    %523 = vmatpush1.xpose.msra.mxu0 0.0
    %524 = vmatprep.subr.mxu0 0.0
    %525 = vmatpush1.xpose.msra.mxu0 0.0
    %526 = vmatprep.subr.mxu0 0.0
    %527 = vmatpush1.xpose.msra.mxu0 0.0
    %528 = vmatprep.subr.mxu0 0.0
    %529 = vmatpush1.xpose.msra.mxu0 0.0
    %530 = vmatprep.subr.mxu0 0.0
    %531 = vmatpush1.xpose.msra.mxu0 0.0
    %532 = vmatprep.subr.mxu0 0.0
    %533 = vmatpush1.xpose.msra.mxu0 0.0
    %534 = vmatprep.subr.mxu0 0.0
    %535 = vmatpush1.xpose.msra.mxu0 0.0
    %536 = vmatprep.subr.mxu0 0.0
    %537 = vmatpush1.xpose.msra.mxu0 0.0
    %538 = vmatprep.subr.mxu0 0.0
    %539 = vmatpush1.xpose.msra.mxu0 0.0
    %540 = vmatprep.subr.mxu0 0.0
    %541 = vmatpush1.xpose.msra.mxu0 0.0
    %542 = vmatprep.subr.mxu0 0.0
    %543 = vmatpush1.xpose.msra.mxu0 0.0
    %544 = vmatprep.subr.mxu0 0.0
    %545 = vmatpush1.xpose.msra.mxu0 0.0
    %546 = vmatprep.subr.mxu0 0.0
    %547 = vmatpush1.xpose.msra.mxu0 0.0
    %548 = vmatprep.subr.mxu0 0.0
    %549 = vmatpush1.xpose.msra.mxu0 0.0
    %550 = vmatprep.subr.mxu0 0.0
    %551 = vmatpush1.xpose.msra.mxu0 0.0
    %552 = vmatprep.subr.mxu0 0.0
    %553 = vmatpush1.xpose.msra.mxu0 0.0
    %554 = vmatprep.subr.mxu0 0.0
    %555 = vmatpush1.xpose.msra.mxu0 0.0
    %556 = vmatprep.subr.mxu0 0.0
    %557 = vmatpush1.xpose.msra.mxu0 0.0
    %558 = vmatprep.mubr.f32.mxu0 0.0
    %559 = vmatmul.mubr.f32.gmra.mrb[0].mxu0 %v490
    %v560 = vpop.f32.mrb[0].mxu0
    %v561 = vadd.f32 0.0, %v560
    %v562 = vpop.f32.mrb[0].mxu0
    %563 = vdwg.mxu0
    %v564 = vsub.f32 %v561, %v231
    %v565 = vsel %vm152, %v564, -inf
    %566 = vmax.xlane.f32.xlu0 %v565
    %v567 = vpop.xlane.xlu0 %566
    %v568 = vsub.f32 %v564, %v567
    %v569 = vmul.f32 %v568, 1.442695
    %v570 = vpow.pop %v569
    %v571 = vsel %vm152, %v570, 0.0
    %572 = vadd.xlane.f32.xlu0 %v571
    %v573 = vpop.xlane.xlu0 %572
    %v574 = vrcp.pop %v573
    %v575 = vmul.f32 %v570, %v574
    %576 = vrot.lane.b32.xlu0 %v136, 48
    %v577 = vpop.permute.xlu0 %576
    %v580 = vsel %vm152, %v575, 0
    %582 = vmatprep.subr.mxu0 0.0
    %583 = vmatpush1.msra.mxu0 %v577
    %584 = vmatprep.subr.mxu0 0.0
    %585 = vmatpush1.msra.mxu0 0.0
    %586 = vmatprep.subr.mxu0 0.0
    %587 = vmatpush1.msra.mxu0 0.0
    %588 = vmatprep.subr.mxu0 0.0
    %589 = vmatpush1.msra.mxu0 0.0
    %590 = vmatprep.subr.mxu0 0.0
    %591 = vmatpush1.msra.mxu0 0.0
    %592 = vmatprep.subr.mxu0 0.0
    %593 = vmatpush1.msra.mxu0 0.0
    %594 = vmatprep.subr.mxu0 0.0
    %595 = vmatpush1.msra.mxu0 0.0
    %596 = vmatprep.subr.mxu0 0.0
    %597 = vmatpush1.msra.mxu0 0.0
    %598 = vmatprep.subr.mxu0 0.0
    %599 = vmatpush1.msra.mxu0 0.0
    %600 = vmatprep.subr.mxu0 0.0
    %601 = vmatpush1.msra.mxu0 0.0
    %602 = vmatprep.subr.mxu0 0.0
    %603 = vmatpush1.msra.mxu0 0.0
    %604 = vmatprep.subr.mxu0 0.0
    %605 = vmatpush1.msra.mxu0 0.0
    %606 = vmatprep.subr.mxu0 0.0
    %607 = vmatpush1.msra.mxu0 0.0
    %608 = vmatprep.subr.mxu0 0.0
    %609 = vmatpush1.msra.mxu0 0.0
    %610 = vmatprep.subr.mxu0 0.0
    %611 = vmatpush1.msra.mxu0 0.0
    %612 = vmatprep.subr.mxu0 0.0
    %613 = vmatpush1.msra.mxu0 0.0
    %614 = vmatprep.subr.mxu0 0.0
    %615 = vmatpush1.msra.mxu0 0.0
    %616 = vmatprep.subr.mxu0 0.0
    %617 = vmatpush1.msra.mxu0 0.0
    %618 = vmatprep.subr.mxu0 0.0
    %619 = vmatpush1.msra.mxu0 0.0
    %620 = vmatprep.subr.mxu0 0.0
    %621 = vmatpush1.msra.mxu0 0.0
    %622 = vmatprep.subr.mxu0 0.0
    %623 = vmatpush1.msra.mxu0 0.0
    %624 = vmatprep.subr.mxu0 0.0
    %625 = vmatpush1.msra.mxu0 0.0
    %626 = vmatprep.subr.mxu0 0.0
    %627 = vmatpush1.msra.mxu0 0.0
    %628 = vmatprep.subr.mxu0 0.0
    %629 = vmatpush1.msra.mxu0 0.0
    %630 = vmatprep.subr.mxu0 0.0
    %631 = vmatpush1.msra.mxu0 0.0
    %632 = vmatprep.subr.mxu0 0.0
    %633 = vmatpush1.msra.mxu0 0.0
    %634 = vmatprep.subr.mxu0 0.0
    %635 = vmatpush1.msra.mxu0 0.0
    %636 = vmatprep.subr.mxu0 0.0
    %637 = vmatpush1.msra.mxu0 0.0
    %638 = vmatprep.subr.mxu0 0.0
    %639 = vmatpush1.msra.mxu0 0.0
    %640 = vmatprep.subr.mxu0 0.0
    %641 = vmatpush1.msra.mxu0 0.0
    %642 = vmatprep.subr.mxu0 0.0
    %643 = vmatpush1.msra.mxu0 0.0
    %644 = vmatprep.subr.mxu0 0.0
    %645 = vmatpush1.msra.mxu0 0.0
    %646 = vmatprep.mubr.f32.mxu0 0.0
    %647 = vmatmul.mubr.f32.gmra.mrb[0].mxu0 %v580
    %v648 = vpop.f32.mrb[0].mxu0
    %v649 = vadd.f32 0.0, %v648
    %v650 = vpop.f32.mrb[0].mxu0
    %651 = vdwg.mxu0
    %652 = vrot.lane.b32.xlu0 %v144, 104
    %v653 = vpop.permute.xlu0 %652
    %654 = vrot.lane.b32.xlu0 %v136, 72
    %v655 = vpop.permute.xlu0 %654
    %v656 = vsel %vm152, %v653, 0
    %v658 = vsel %vm152, %v655, 0
    %660 = vmatprep.subr.mxu0 0.0
    %661 = vmatpush1.xpose.msra.mxu0 %v658
    %662 = vmatprep.subr.mxu0 0.0
    %663 = vmatpush1.xpose.msra.mxu0 0.0
    %664 = vmatprep.subr.mxu0 0.0
    %665 = vmatpush1.xpose.msra.mxu0 0.0
    %666 = vmatprep.subr.mxu0 0.0
    %667 = vmatpush1.xpose.msra.mxu0 0.0
    %668 = vmatprep.subr.mxu0 0.0
    %669 = vmatpush1.xpose.msra.mxu0 0.0
    %670 = vmatprep.subr.mxu0 0.0
    %671 = vmatpush1.xpose.msra.mxu0 0.0
    %672 = vmatprep.subr.mxu0 0.0
    %673 = vmatpush1.xpose.msra.mxu0 0.0
    %674 = vmatprep.subr.mxu0 0.0
    %675 = vmatpush1.xpose.msra.mxu0 0.0
    %676 = vmatprep.subr.mxu0 0.0
    %677 = vmatpush1.xpose.msra.mxu0 0.0
    %678 = vmatprep.subr.mxu0 0.0
    %679 = vmatpush1.xpose.msra.mxu0 0.0
    %680 = vmatprep.subr.mxu0 0.0
    %681 = vmatpush1.xpose.msra.mxu0 0.0
    %682 = vmatprep.subr.mxu0 0.0
    %683 = vmatpush1.xpose.msra.mxu0 0.0
    %684 = vmatprep.subr.mxu0 0.0
    %685 = vmatpush1.xpose.msra.mxu0 0.0
    %686 = vmatprep.subr.mxu0 0.0
    %687 = vmatpush1.xpose.msra.mxu0 0.0
    %688 = vmatprep.subr.mxu0 0.0
    %689 = vmatpush1.xpose.msra.mxu0 0.0
    %690 = vmatprep.subr.mxu0 0.0
    %691 = vmatpush1.xpose.msra.mxu0 0.0
    %692 = vmatprep.subr.mxu0 0.0
    %693 = vmatpush1.xpose.msra.mxu0 0.0
    %694 = vmatprep.subr.mxu0 0.0
    %695 = vmatpush1.xpose.msra.mxu0 0.0
    %696 = vmatprep.subr.mxu0 0.0
    %697 = vmatpush1.xpose.msra.mxu0 0.0
    %698 = vmatprep.subr.mxu0 0.0
    %699 = vmatpush1.xpose.msra.mxu0 0.0
    %700 = vmatprep.subr.mxu0 0.0
    %701 = vmatpush1.xpose.msra.mxu0 0.0
    %702 = vmatprep.subr.mxu0 0.0
    %703 = vmatpush1.xpose.msra.mxu0 0.0
    %704 = vmatprep.subr.mxu0 0.0
    %705 = vmatpush1.xpose.msra.mxu0 0.0
    %706 = vmatprep.subr.mxu0 0.0
    %707 = vmatpush1.xpose.msra.mxu0 0.0
    %708 = vmatprep.subr.mxu0 0.0
    %709 = vmatpush1.xpose.msra.mxu0 0.0
    %710 = vmatprep.subr.mxu0 0.0
    %711 = vmatpush1.xpose.msra.mxu0 0.0
    %712 = vmatprep.subr.mxu0 0.0
    %713 = vmatpush1.xpose.msra.mxu0 0.0
    %714 = vmatprep.subr.mxu0 0.0
    %715 = vmatpush1.xpose.msra.mxu0 0.0
    %716 = vmatprep.subr.mxu0 0.0
    %717 = vmatpush1.xpose.msra.mxu0 0.0
    %718 = vmatprep.subr.mxu0 0.0
    %719 = vmatpush1.xpose.msra.mxu0 0.0
    %720 = vmatprep.subr.mxu0 0.0
    %721 = vmatpush1.xpose.msra.mxu0 0.0
    %722 = vmatprep.subr.mxu0 0.0
    %723 = vmatpush1.xpose.msra.mxu0 0.0
    %724 = vmatprep.mubr.f32.mxu0 0.0
    %725 = vmatmul.mubr.f32.gmra.mrb[0].mxu0 %v656
    %v726 = vpop.f32.mrb[0].mxu0
    %v727 = vadd.f32 0.0, %v726
    %v728 = vpop.f32.mrb[0].mxu0
    %729 = vdwg.mxu0
    %v730 = vsub.f32 %v727, %v231
    %v731 = vsel %vm152, %v730, -inf
    %732 = vmax.xlane.f32.xlu0 %v731
    %v733 = vpop.xlane.xlu0 %732
    %v734 = vsub.f32 %v730, %v733
    %v735 = vmul.f32 %v734, 1.442695
    %v736 = vpow.pop %v735
    %v737 = vsel %vm152, %v736, 0.0
    %738 = vadd.xlane.f32.xlu0 %v737
    %v739 = vpop.xlane.xlu0 %738
    %v740 = vrcp.pop %v739
    %v741 = vmul.f32 %v736, %v740
    %742 = vrot.lane.b32.xlu0 %v136, 40
    %v743 = vpop.permute.xlu0 %742
    %v746 = vsel %vm152, %v741, 0
    %748 = vmatprep.subr.mxu0 0.0
    %749 = vmatpush1.msra.mxu0 %v743
    %750 = vmatprep.subr.mxu0 0.0
    %751 = vmatpush1.msra.mxu0 0.0
    %752 = vmatprep.subr.mxu0 0.0
    %753 = vmatpush1.msra.mxu0 0.0
    %754 = vmatprep.subr.mxu0 0.0
    %755 = vmatpush1.msra.mxu0 0.0
    %756 = vmatprep.subr.mxu0 0.0
    %757 = vmatpush1.msra.mxu0 0.0
    %758 = vmatprep.subr.mxu0 0.0
    %759 = vmatpush1.msra.mxu0 0.0
    %760 = vmatprep.subr.mxu0 0.0
    %761 = vmatpush1.msra.mxu0 0.0
    %762 = vmatprep.subr.mxu0 0.0
    %763 = vmatpush1.msra.mxu0 0.0
    %764 = vmatprep.subr.mxu0 0.0
    %765 = vmatpush1.msra.mxu0 0.0
    %766 = vmatprep.subr.mxu0 0.0
    %767 = vmatpush1.msra.mxu0 0.0
    %768 = vmatprep.subr.mxu0 0.0
    %769 = vmatpush1.msra.mxu0 0.0
    %770 = vmatprep.subr.mxu0 0.0
    %771 = vmatpush1.msra.mxu0 0.0
    %772 = vmatprep.subr.mxu0 0.0
    %773 = vmatpush1.msra.mxu0 0.0
    %774 = vmatprep.subr.mxu0 0.0
    %775 = vmatpush1.msra.mxu0 0.0
    %776 = vmatprep.subr.mxu0 0.0
    %777 = vmatpush1.msra.mxu0 0.0
    %778 = vmatprep.subr.mxu0 0.0
    %779 = vmatpush1.msra.mxu0 0.0
    %780 = vmatprep.subr.mxu0 0.0
    %781 = vmatpush1.msra.mxu0 0.0
    %782 = vmatprep.subr.mxu0 0.0
    %783 = vmatpush1.msra.mxu0 0.0
    %784 = vmatprep.subr.mxu0 0.0
    %785 = vmatpush1.msra.mxu0 0.0
    %786 = vmatprep.subr.mxu0 0.0
    %787 = vmatpush1.msra.mxu0 0.0
    %788 = vmatprep.subr.mxu0 0.0
    %789 = vmatpush1.msra.mxu0 0.0
    %790 = vmatprep.subr.mxu0 0.0
    %791 = vmatpush1.msra.mxu0 0.0
    %792 = vmatprep.subr.mxu0 0.0
    %793 = vmatpush1.msra.mxu0 0.0
    %794 = vmatprep.subr.mxu0 0.0
    %795 = vmatpush1.msra.mxu0 0.0
    %796 = vmatprep.subr.mxu0 0.0
    %797 = vmatpush1.msra.mxu0 0.0
    %798 = vmatprep.subr.mxu0 0.0
    %799 = vmatpush1.msra.mxu0 0.0
    %800 = vmatprep.subr.mxu0 0.0
    %801 = vmatpush1.msra.mxu0 0.0
    %802 = vmatprep.subr.mxu0 0.0
    %803 = vmatpush1.msra.mxu0 0.0
    %804 = vmatprep.subr.mxu0 0.0
    %805 = vmatpush1.msra.mxu0 0.0
    %806 = vmatprep.subr.mxu0 0.0
    %807 = vmatpush1.msra.mxu0 0.0
    %808 = vmatprep.subr.mxu0 0.0
    %809 = vmatpush1.msra.mxu0 0.0
    %810 = vmatprep.subr.mxu0 0.0
    %811 = vmatpush1.msra.mxu0 0.0
    %812 = vmatprep.mubr.f32.mxu0 0.0
    %813 = vmatmul.mubr.f32.gmra.mrb[0].mxu0 %v746
    %v814 = vpop.f32.mrb[0].mxu0
    %v815 = vadd.f32 0.0, %v814
    %v816 = vpop.f32.mrb[0].mxu0
    %817 = vdwg.mxu0
    %819 = vrot.lane.b32.xlu0 %v483, 8
    %v820 = vpop.permute.xlu0 %819
    %823 = vrot.lane.b32.xlu0 %v649, 16
    %v824 = vpop.permute.xlu0 %823
    %827 = vrot.lane.b32.xlu0 %v815, 24
    %v828 = vpop.permute.xlu0 %827
    %v830 = vsel %vm152, %v317, %v820
    %vm831 = vcmask 130048
    %v832 = vsel %vm831, %v830, %v824
    %vm833 = vcmask 195584
    %v834 = vsel %vm833, %v832, %v828
    %835 = vrot.lane.b32.xlu0 %v409, 8
    %v836 = vpop.permute.xlu0 %835
    %838 = vrot.lane.b32.xlu0 %v575, 16
    %v839 = vpop.permute.xlu0 %838
    %841 = vrot.lane.b32.xlu0 %v741, 24
    %v842 = vpop.permute.xlu0 %841
    %v844 = vsel %vm152, %v243, %v836
    %v845 = vsel %vm831, %v844, %v839
    %v846 = vsel %vm833, %v845, %v842
    %848 = vrot.lane.b32.xlu0 %v141, 96
    %v849 = vpop.permute.xlu0 %848
    %v851 = vsel %vm152, %v145, 0
    %v853 = vsel %vm152, %v849, 0
    %855 = vmatprep.subr.mxu0 0.0
    %856 = vmatpush1.xpose.msra.mxu0 %v853
    %857 = vmatprep.subr.mxu0 0.0
    %858 = vmatpush1.xpose.msra.mxu0 0.0
    %859 = vmatprep.subr.mxu0 0.0
    %860 = vmatpush1.xpose.msra.mxu0 0.0
    %861 = vmatprep.subr.mxu0 0.0
    %862 = vmatpush1.xpose.msra.mxu0 0.0
    %863 = vmatprep.subr.mxu0 0.0
    %864 = vmatpush1.xpose.msra.mxu0 0.0
    %865 = vmatprep.subr.mxu0 0.0
    %866 = vmatpush1.xpose.msra.mxu0 0.0
    %867 = vmatprep.subr.mxu0 0.0
    %868 = vmatpush1.xpose.msra.mxu0 0.0
    %869 = vmatprep.subr.mxu0 0.0
    %870 = vmatpush1.xpose.msra.mxu0 0.0
    %871 = vmatprep.subr.mxu0 0.0
    %872 = vmatpush1.xpose.msra.mxu0 0.0
    %873 = vmatprep.subr.mxu0 0.0
    %874 = vmatpush1.xpose.msra.mxu0 0.0
    %875 = vmatprep.subr.mxu0 0.0
    %876 = vmatpush1.xpose.msra.mxu0 0.0
    %877 = vmatprep.subr.mxu0 0.0
    %878 = vmatpush1.xpose.msra.mxu0 0.0
    %879 = vmatprep.subr.mxu0 0.0
    %880 = vmatpush1.xpose.msra.mxu0 0.0
    %881 = vmatprep.subr.mxu0 0.0
    %882 = vmatpush1.xpose.msra.mxu0 0.0
    %883 = vmatprep.subr.mxu0 0.0
    %884 = vmatpush1.xpose.msra.mxu0 0.0
    %885 = vmatprep.subr.mxu0 0.0
    %886 = vmatpush1.xpose.msra.mxu0 0.0
    %887 = vmatprep.subr.mxu0 0.0
    %888 = vmatpush1.xpose.msra.mxu0 0.0
    %889 = vmatprep.subr.mxu0 0.0
    %890 = vmatpush1.xpose.msra.mxu0 0.0
    %891 = vmatprep.subr.mxu0 0.0
    %892 = vmatpush1.xpose.msra.mxu0 0.0
    %893 = vmatprep.subr.mxu0 0.0
    %894 = vmatpush1.xpose.msra.mxu0 0.0
    %895 = vmatprep.subr.mxu0 0.0
    %896 = vmatpush1.xpose.msra.mxu0 0.0
    %897 = vmatprep.subr.mxu0 0.0
    %898 = vmatpush1.xpose.msra.mxu0 0.0
    %899 = vmatprep.subr.mxu0 0.0
    %900 = vmatpush1.xpose.msra.mxu0 0.0
    %901 = vmatprep.subr.mxu0 0.0
    %902 = vmatpush1.xpose.msra.mxu0 0.0
    %903 = vmatprep.subr.mxu0 0.0
    %904 = vmatpush1.xpose.msra.mxu0 0.0
    %905 = vmatprep.subr.mxu0 0.0
    %906 = vmatpush1.xpose.msra.mxu0 0.0
    %907 = vmatprep.subr.mxu0 0.0
    %908 = vmatpush1.xpose.msra.mxu0 0.0
    %909 = vmatprep.subr.mxu0 0.0
    %910 = vmatpush1.xpose.msra.mxu0 0.0
    %911 = vmatprep.subr.mxu0 0.0
    %912 = vmatpush1.xpose.msra.mxu0 0.0
    %913 = vmatprep.subr.mxu0 0.0
    %914 = vmatpush1.xpose.msra.mxu0 0.0
    %915 = vmatprep.subr.mxu0 0.0
    %916 = vmatpush1.xpose.msra.mxu0 0.0
    %917 = vmatprep.subr.mxu0 0.0
    %918 = vmatpush1.xpose.msra.mxu0 0.0
    %919 = vmatprep.mubr.f32.mxu0 0.0
    %920 = vmatmul.mubr.f32.gmra.mrb[0].mxu0 %v851
    %v921 = vpop.f32.mrb[0].mxu0
    %v922 = vadd.f32 0.0, %v921
    %v923 = vpop.f32.mrb[0].mxu0
    %924 = vdwg.mxu0
    %v925 = vlaneseq
    %v926 = vshrl.u32 %v925, 7
    %v927 = vsub.s32 1, %v926
    %v928 = vrot.slane %v148, %v927
    %v929 = vsub.f32 %v922, %v928
    %v930 = vsel %vm152, %v929, -inf
    %931 = vmax.xlane.f32.xlu0 %v930
    %v932 = vpop.xlane.xlu0 %931
    %v933 = vsub.f32 %v929, %v932
    %v934 = vmul.f32 %v933, 1.442695
    %v935 = vpow.pop %v934
    %v936 = vsel %vm152, %v935, 0.0
    %937 = vadd.xlane.f32.xlu0 %v936
    %v938 = vpop.xlane.xlu0 %937
    %v939 = vrcp.pop %v938
    %v940 = vmul.f32 %v935, %v939
    %941 = vrot.lane.b32.xlu0 %v141, 64
    %v942 = vpop.permute.xlu0 %941
    %v945 = vsel %vm152, %v940, 0
    %947 = vmatprep.subr.mxu0 0.0
    %948 = vmatpush1.msra.mxu0 %v942
    %949 = vmatprep.subr.mxu0 0.0
    %950 = vmatpush1.msra.mxu0 0.0
    %951 = vmatprep.subr.mxu0 0.0
    %952 = vmatpush1.msra.mxu0 0.0
    %953 = vmatprep.subr.mxu0 0.0
    %954 = vmatpush1.msra.mxu0 0.0
    %955 = vmatprep.subr.mxu0 0.0
    %956 = vmatpush1.msra.mxu0 0.0
    %957 = vmatprep.subr.mxu0 0.0
    %958 = vmatpush1.msra.mxu0 0.0
    %959 = vmatprep.subr.mxu0 0.0
    %960 = vmatpush1.msra.mxu0 0.0
    %961 = vmatprep.subr.mxu0 0.0
    %962 = vmatpush1.msra.mxu0 0.0
    %963 = vmatprep.subr.mxu0 0.0
    %964 = vmatpush1.msra.mxu0 0.0
    %965 = vmatprep.subr.mxu0 0.0
    %966 = vmatpush1.msra.mxu0 0.0
    %967 = vmatprep.subr.mxu0 0.0
    %968 = vmatpush1.msra.mxu0 0.0
    %969 = vmatprep.subr.mxu0 0.0
    %970 = vmatpush1.msra.mxu0 0.0
    %971 = vmatprep.subr.mxu0 0.0
    %972 = vmatpush1.msra.mxu0 0.0
    %973 = vmatprep.subr.mxu0 0.0
    %974 = vmatpush1.msra.mxu0 0.0
    %975 = vmatprep.subr.mxu0 0.0
    %976 = vmatpush1.msra.mxu0 0.0
    %977 = vmatprep.subr.mxu0 0.0
    %978 = vmatpush1.msra.mxu0 0.0
    %979 = vmatprep.subr.mxu0 0.0
    %980 = vmatpush1.msra.mxu0 0.0
    %981 = vmatprep.subr.mxu0 0.0
    %982 = vmatpush1.msra.mxu0 0.0
    %983 = vmatprep.subr.mxu0 0.0
    %984 = vmatpush1.msra.mxu0 0.0
    %985 = vmatprep.subr.mxu0 0.0
    %986 = vmatpush1.msra.mxu0 0.0
    %987 = vmatprep.subr.mxu0 0.0
    %988 = vmatpush1.msra.mxu0 0.0
    %989 = vmatprep.subr.mxu0 0.0
    %990 = vmatpush1.msra.mxu0 0.0
    %991 = vmatprep.subr.mxu0 0.0
    %992 = vmatpush1.msra.mxu0 0.0
    %993 = vmatprep.subr.mxu0 0.0
    %994 = vmatpush1.msra.mxu0 0.0
    %995 = vmatprep.subr.mxu0 0.0
    %996 = vmatpush1.msra.mxu0 0.0
    %997 = vmatprep.subr.mxu0 0.0
    %998 = vmatpush1.msra.mxu0 0.0
    %999 = vmatprep.subr.mxu0 0.0
    %1000 = vmatpush1.msra.mxu0 0.0
    %1001 = vmatprep.subr.mxu0 0.0
    %1002 = vmatpush1.msra.mxu0 0.0
    %1003 = vmatprep.subr.mxu0 0.0
    %1004 = vmatpush1.msra.mxu0 0.0
    %1005 = vmatprep.subr.mxu0 0.0
    %1006 = vmatpush1.msra.mxu0 0.0
    %1007 = vmatprep.subr.mxu0 0.0
    %1008 = vmatpush1.msra.mxu0 0.0
    %1009 = vmatprep.subr.mxu0 0.0
    %1010 = vmatpush1.msra.mxu0 0.0
    %1011 = vmatprep.mubr.f32.mxu0 0.0
    %1012 = vmatmul.mubr.f32.gmra.mrb[0].mxu0 %v945
    %v1013 = vpop.f32.mrb[0].mxu0
    %v1014 = vadd.f32 0.0, %v1013
    %v1015 = vpop.f32.mrb[0].mxu0
    %1016 = vdwg.mxu0
    %1017 = vrot.lane.b32.xlu0 %v145, 120
    %v1018 = vpop.permute.xlu0 %1017
    %1019 = vrot.lane.b32.xlu0 %v141, 88
    %v1020 = vpop.permute.xlu0 %1019
    %v1021 = vsel %vm152, %v1018, 0
    %v1023 = vsel %vm152, %v1020, 0
    %1025 = vmatprep.subr.mxu0 0.0
    %1026 = vmatpush1.xpose.msra.mxu0 %v1023
    %1027 = vmatprep.subr.mxu0 0.0
    %1028 = vmatpush1.xpose.msra.mxu0 0.0
    %1029 = vmatprep.subr.mxu0 0.0
    %1030 = vmatpush1.xpose.msra.mxu0 0.0
    %1031 = vmatprep.subr.mxu0 0.0
    %1032 = vmatpush1.xpose.msra.mxu0 0.0
    %1033 = vmatprep.subr.mxu0 0.0
    %1034 = vmatpush1.xpose.msra.mxu0 0.0
    %1035 = vmatprep.subr.mxu0 0.0
    %1036 = vmatpush1.xpose.msra.mxu0 0.0
    %1037 = vmatprep.subr.mxu0 0.0
    %1038 = vmatpush1.xpose.msra.mxu0 0.0
    %1039 = vmatprep.subr.mxu0 0.0
    %1040 = vmatpush1.xpose.msra.mxu0 0.0
    %1041 = vmatprep.subr.mxu0 0.0
    %1042 = vmatpush1.xpose.msra.mxu0 0.0
    %1043 = vmatprep.subr.mxu0 0.0
    %1044 = vmatpush1.xpose.msra.mxu0 0.0
    %1045 = vmatprep.subr.mxu0 0.0
    %1046 = vmatpush1.xpose.msra.mxu0 0.0
    %1047 = vmatprep.subr.mxu0 0.0
    %1048 = vmatpush1.xpose.msra.mxu0 0.0
    %1049 = vmatprep.subr.mxu0 0.0
    %1050 = vmatpush1.xpose.msra.mxu0 0.0
    %1051 = vmatprep.subr.mxu0 0.0
    %1052 = vmatpush1.xpose.msra.mxu0 0.0
    %1053 = vmatprep.subr.mxu0 0.0
    %1054 = vmatpush1.xpose.msra.mxu0 0.0
    %1055 = vmatprep.subr.mxu0 0.0
    %1056 = vmatpush1.xpose.msra.mxu0 0.0
    %1057 = vmatprep.subr.mxu0 0.0
    %1058 = vmatpush1.xpose.msra.mxu0 0.0
    %1059 = vmatprep.subr.mxu0 0.0
    %1060 = vmatpush1.xpose.msra.mxu0 0.0
    %1061 = vmatprep.subr.mxu0 0.0
    %1062 = vmatpush1.xpose.msra.mxu0 0.0
    %1063 = vmatprep.subr.mxu0 0.0
    %1064 = vmatpush1.xpose.msra.mxu0 0.0
    %1065 = vmatprep.subr.mxu0 0.0
    %1066 = vmatpush1.xpose.msra.mxu0 0.0
    %1067 = vmatprep.subr.mxu0 0.0
    %1068 = vmatpush1.xpose.msra.mxu0 0.0
    %1069 = vmatprep.subr.mxu0 0.0
    %1070 = vmatpush1.xpose.msra.mxu0 0.0
    %1071 = vmatprep.subr.mxu0 0.0
    %1072 = vmatpush1.xpose.msra.mxu0 0.0
    %1073 = vmatprep.subr.mxu0 0.0
    %1074 = vmatpush1.xpose.msra.mxu0 0.0
    %1075 = vmatprep.subr.mxu0 0.0
    %1076 = vmatpush1.xpose.msra.mxu0 0.0
    %1077 = vmatprep.subr.mxu0 0.0
    %1078 = vmatpush1.xpose.msra.mxu0 0.0
    %1079 = vmatprep.subr.mxu0 0.0
    %1080 = vmatpush1.xpose.msra.mxu0 0.0
    %1081 = vmatprep.subr.mxu0 0.0
    %1082 = vmatpush1.xpose.msra.mxu0 0.0
    %1083 = vmatprep.subr.mxu0 0.0
    %1084 = vmatpush1.xpose.msra.mxu0 0.0
    %1085 = vmatprep.subr.mxu0 0.0
    %1086 = vmatpush1.xpose.msra.mxu0 0.0
    %1087 = vmatprep.subr.mxu0 0.0
    %1088 = vmatpush1.xpose.msra.mxu0 0.0
    %1089 = vmatprep.mubr.f32.mxu0 0.0
    %1090 = vmatmul.mubr.f32.gmra.mrb[0].mxu0 %v1021
    %v1091 = vpop.f32.mrb[0].mxu0
    %v1092 = vadd.f32 0.0, %v1091
    %v1093 = vpop.f32.mrb[0].mxu0
    %1094 = vdwg.mxu0
    %v1095 = vsub.f32 %v1092, %v928
    %v1096 = vsel %vm152, %v1095, -inf
    %1097 = vmax.xlane.f32.xlu0 %v1096
    %v1098 = vpop.xlane.xlu0 %1097
    %v1099 = vsub.f32 %v1095, %v1098
    %v1100 = vmul.f32 %v1099, 1.442695
    %v1101 = vpow.pop %v1100
    %v1102 = vsel %vm152, %v1101, 0.0
    %1103 = vadd.xlane.f32.xlu0 %v1102
    %v1104 = vpop.xlane.xlu0 %1103
    %v1105 = vrcp.pop %v1104
    %v1106 = vmul.f32 %v1101, %v1105
    %1107 = vrot.lane.b32.xlu0 %v141, 56
    %v1108 = vpop.permute.xlu0 %1107
    %v1111 = vsel %vm152, %v1106, 0
    %1113 = vmatprep.subr.mxu0 0.0
    %1114 = vmatpush1.msra.mxu0 %v1108
    %1115 = vmatprep.subr.mxu0 0.0
    %1116 = vmatpush1.msra.mxu0 0.0
    %1117 = vmatprep.subr.mxu0 0.0
    %1118 = vmatpush1.msra.mxu0 0.0
    %1119 = vmatprep.subr.mxu0 0.0
    %1120 = vmatpush1.msra.mxu0 0.0
    %1121 = vmatprep.subr.mxu0 0.0
    %1122 = vmatpush1.msra.mxu0 0.0
    %1123 = vmatprep.subr.mxu0 0.0
    %1124 = vmatpush1.msra.mxu0 0.0
    %1125 = vmatprep.subr.mxu0 0.0
    %1126 = vmatpush1.msra.mxu0 0.0
    %1127 = vmatprep.subr.mxu0 0.0
    %1128 = vmatpush1.msra.mxu0 0.0
    %1129 = vmatprep.subr.mxu0 0.0
    %1130 = vmatpush1.msra.mxu0 0.0
    %1131 = vmatprep.subr.mxu0 0.0
    %1132 = vmatpush1.msra.mxu0 0.0
    %1133 = vmatprep.subr.mxu0 0.0
    %1134 = vmatpush1.msra.mxu0 0.0
    %1135 = vmatprep.subr.mxu0 0.0
    %1136 = vmatpush1.msra.mxu0 0.0
    %1137 = vmatprep.subr.mxu0 0.0
    %1138 = vmatpush1.msra.mxu0 0.0
    %1139 = vmatprep.subr.mxu0 0.0
    %1140 = vmatpush1.msra.mxu0 0.0
    %1141 = vmatprep.subr.mxu0 0.0
    %1142 = vmatpush1.msra.mxu0 0.0
    %1143 = vmatprep.subr.mxu0 0.0
    %1144 = vmatpush1.msra.mxu0 0.0
    %1145 = vmatprep.subr.mxu0 0.0
    %1146 = vmatpush1.msra.mxu0 0.0
    %1147 = vmatprep.subr.mxu0 0.0
    %1148 = vmatpush1.msra.mxu0 0.0
    %1149 = vmatprep.subr.mxu0 0.0
    %1150 = vmatpush1.msra.mxu0 0.0
    %1151 = vmatprep.subr.mxu0 0.0
    %1152 = vmatpush1.msra.mxu0 0.0
    %1153 = vmatprep.subr.mxu0 0.0
    %1154 = vmatpush1.msra.mxu0 0.0
    %1155 = vmatprep.subr.mxu0 0.0
    %1156 = vmatpush1.msra.mxu0 0.0
    %1157 = vmatprep.subr.mxu0 0.0
    %1158 = vmatpush1.msra.mxu0 0.0
    %1159 = vmatprep.subr.mxu0 0.0
    %1160 = vmatpush1.msra.mxu0 0.0
    %1161 = vmatprep.subr.mxu0 0.0
    %1162 = vmatpush1.msra.mxu0 0.0
    %1163 = vmatprep.subr.mxu0 0.0
    %1164 = vmatpush1.msra.mxu0 0.0
    %1165 = vmatprep.subr.mxu0 0.0
    %1166 = vmatpush1.msra.mxu0 0.0
    %1167 = vmatprep.subr.mxu0 0.0
    %1168 = vmatpush1.msra.mxu0 0.0
    %1169 = vmatprep.subr.mxu0 0.0
    %1170 = vmatpush1.msra.mxu0 0.0
    %1171 = vmatprep.subr.mxu0 0.0
    %1172 = vmatpush1.msra.mxu0 0.0
    %1173 = vmatprep.subr.mxu0 0.0
    %1174 = vmatpush1.msra.mxu0 0.0
    %1175 = vmatprep.subr.mxu0 0.0
    %1176 = vmatpush1.msra.mxu0 0.0
    %1177 = vmatprep.mubr.f32.mxu0 0.0
    %1178 = vmatmul.mubr.f32.gmra.mrb[0].mxu0 %v1111
    %v1179 = vpop.f32.mrb[0].mxu0
    %v1180 = vadd.f32 0.0, %v1179
    %v1181 = vpop.f32.mrb[0].mxu0
    %1182 = vdwg.mxu0
    %1183 = vrot.lane.b32.xlu0 %v145, 112
    %v1184 = vpop.permute.xlu0 %1183
    %1185 = vrot.lane.b32.xlu0 %v141, 80
    %v1186 = vpop.permute.xlu0 %1185
    %v1187 = vsel %vm152, %v1184, 0
    %v1189 = vsel %vm152, %v1186, 0
    %1191 = vmatprep.subr.mxu0 0.0
    %1192 = vmatpush1.xpose.msra.mxu0 %v1189
    %1193 = vmatprep.subr.mxu0 0.0
    %1194 = vmatpush1.xpose.msra.mxu0 0.0
    %1195 = vmatprep.subr.mxu0 0.0
    %1196 = vmatpush1.xpose.msra.mxu0 0.0
    %1197 = vmatprep.subr.mxu0 0.0
    %1198 = vmatpush1.xpose.msra.mxu0 0.0
    %1199 = vmatprep.subr.mxu0 0.0
    %1200 = vmatpush1.xpose.msra.mxu0 0.0
    %1201 = vmatprep.subr.mxu0 0.0
    %1202 = vmatpush1.xpose.msra.mxu0 0.0
    %1203 = vmatprep.subr.mxu0 0.0
    %1204 = vmatpush1.xpose.msra.mxu0 0.0
    %1205 = vmatprep.subr.mxu0 0.0
    %1206 = vmatpush1.xpose.msra.mxu0 0.0
    %1207 = vmatprep.subr.mxu0 0.0
    %1208 = vmatpush1.xpose.msra.mxu0 0.0
    %1209 = vmatprep.subr.mxu0 0.0
    %1210 = vmatpush1.xpose.msra.mxu0 0.0
    %1211 = vmatprep.subr.mxu0 0.0
    %1212 = vmatpush1.xpose.msra.mxu0 0.0
    %1213 = vmatprep.subr.mxu0 0.0
    %1214 = vmatpush1.xpose.msra.mxu0 0.0
    %1215 = vmatprep.subr.mxu0 0.0
    %1216 = vmatpush1.xpose.msra.mxu0 0.0
    %1217 = vmatprep.subr.mxu0 0.0
    %1218 = vmatpush1.xpose.msra.mxu0 0.0
    %1219 = vmatprep.subr.mxu0 0.0
    %1220 = vmatpush1.xpose.msra.mxu0 0.0
    %1221 = vmatprep.subr.mxu0 0.0
    %1222 = vmatpush1.xpose.msra.mxu0 0.0
    %1223 = vmatprep.subr.mxu0 0.0
    %1224 = vmatpush1.xpose.msra.mxu0 0.0
    %1225 = vmatprep.subr.mxu0 0.0
    %1226 = vmatpush1.xpose.msra.mxu0 0.0
    %1227 = vmatprep.subr.mxu0 0.0
    %1228 = vmatpush1.xpose.msra.mxu0 0.0
    %1229 = vmatprep.subr.mxu0 0.0
    %1230 = vmatpush1.xpose.msra.mxu0 0.0
    %1231 = vmatprep.subr.mxu0 0.0
    %1232 = vmatpush1.xpose.msra.mxu0 0.0
    %1233 = vmatprep.subr.mxu0 0.0
    %1234 = vmatpush1.xpose.msra.mxu0 0.0
    %1235 = vmatprep.subr.mxu0 0.0
    %1236 = vmatpush1.xpose.msra.mxu0 0.0
    %1237 = vmatprep.subr.mxu0 0.0
    %1238 = vmatpush1.xpose.msra.mxu0 0.0
    %1239 = vmatprep.subr.mxu0 0.0
    %1240 = vmatpush1.xpose.msra.mxu0 0.0
    %1241 = vmatprep.subr.mxu0 0.0
    %1242 = vmatpush1.xpose.msra.mxu0 0.0
    %1243 = vmatprep.subr.mxu0 0.0
    %1244 = vmatpush1.xpose.msra.mxu0 0.0
    %1245 = vmatprep.subr.mxu0 0.0
    %1246 = vmatpush1.xpose.msra.mxu0 0.0
    %1247 = vmatprep.subr.mxu0 0.0
    %1248 = vmatpush1.xpose.msra.mxu0 0.0
    %1249 = vmatprep.subr.mxu0 0.0
    %1250 = vmatpush1.xpose.msra.mxu0 0.0
    %1251 = vmatprep.subr.mxu0 0.0
    %1252 = vmatpush1.xpose.msra.mxu0 0.0
    %1253 = vmatprep.subr.mxu0 0.0
    %1254 = vmatpush1.xpose.msra.mxu0 0.0
    %1255 = vmatprep.mubr.f32.mxu0 0.0
    %1256 = vmatmul.mubr.f32.gmra.mrb[0].mxu0 %v1187
    %v1257 = vpop.f32.mrb[0].mxu0
    %v1258 = vadd.f32 0.0, %v1257
    %v1259 = vpop.f32.mrb[0].mxu0
    %1260 = vdwg.mxu0
    %v1261 = vsub.f32 %v1258, %v928
    %v1262 = vsel %vm152, %v1261, -inf
    %1263 = vmax.xlane.f32.xlu0 %v1262
    %v1264 = vpop.xlane.xlu0 %1263
    %v1265 = vsub.f32 %v1261, %v1264
    %v1266 = vmul.f32 %v1265, 1.442695
    %v1267 = vpow.pop %v1266
    %v1268 = vsel %vm152, %v1267, 0.0
    %1269 = vadd.xlane.f32.xlu0 %v1268
    %v1270 = vpop.xlane.xlu0 %1269
    %v1271 = vrcp.pop %v1270
    %v1272 = vmul.f32 %v1267, %v1271
    %1273 = vrot.lane.b32.xlu0 %v141, 48
    %v1274 = vpop.permute.xlu0 %1273
    %v1277 = vsel %vm152, %v1272, 0
    %1279 = vmatprep.subr.mxu0 0.0
    %1280 = vmatpush1.msra.mxu0 %v1274
    %1281 = vmatprep.subr.mxu0 0.0
    %1282 = vmatpush1.msra.mxu0 0.0
    %1283 = vmatprep.subr.mxu0 0.0
    %1284 = vmatpush1.msra.mxu0 0.0
    %1285 = vmatprep.subr.mxu0 0.0
    %1286 = vmatpush1.msra.mxu0 0.0
    %1287 = vmatprep.subr.mxu0 0.0
    %1288 = vmatpush1.msra.mxu0 0.0
    %1289 = vmatprep.subr.mxu0 0.0
    %1290 = vmatpush1.msra.mxu0 0.0
    %1291 = vmatprep.subr.mxu0 0.0
    %1292 = vmatpush1.msra.mxu0 0.0
    %1293 = vmatprep.subr.mxu0 0.0
    %1294 = vmatpush1.msra.mxu0 0.0
    %1295 = vmatprep.subr.mxu0 0.0
    %1296 = vmatpush1.msra.mxu0 0.0
    %1297 = vmatprep.subr.mxu0 0.0
    %1298 = vmatpush1.msra.mxu0 0.0
    %1299 = vmatprep.subr.mxu0 0.0
    %1300 = vmatpush1.msra.mxu0 0.0
    %1301 = vmatprep.subr.mxu0 0.0
    %1302 = vmatpush1.msra.mxu0 0.0
    %1303 = vmatprep.subr.mxu0 0.0
    %1304 = vmatpush1.msra.mxu0 0.0
    %1305 = vmatprep.subr.mxu0 0.0
    %1306 = vmatpush1.msra.mxu0 0.0
    %1307 = vmatprep.subr.mxu0 0.0
    %1308 = vmatpush1.msra.mxu0 0.0
    %1309 = vmatprep.subr.mxu0 0.0
    %1310 = vmatpush1.msra.mxu0 0.0
    %1311 = vmatprep.subr.mxu0 0.0
    %1312 = vmatpush1.msra.mxu0 0.0
    %1313 = vmatprep.subr.mxu0 0.0
    %1314 = vmatpush1.msra.mxu0 0.0
    %1315 = vmatprep.subr.mxu0 0.0
    %1316 = vmatpush1.msra.mxu0 0.0
    %1317 = vmatprep.subr.mxu0 0.0
    %1318 = vmatpush1.msra.mxu0 0.0
    %1319 = vmatprep.subr.mxu0 0.0
    %1320 = vmatpush1.msra.mxu0 0.0
    %1321 = vmatprep.subr.mxu0 0.0
    %1322 = vmatpush1.msra.mxu0 0.0
    %1323 = vmatprep.subr.mxu0 0.0
    %1324 = vmatpush1.msra.mxu0 0.0
    %1325 = vmatprep.subr.mxu0 0.0
    %1326 = vmatpush1.msra.mxu0 0.0
    %1327 = vmatprep.subr.mxu0 0.0
    %1328 = vmatpush1.msra.mxu0 0.0
    %1329 = vmatprep.subr.mxu0 0.0
    %1330 = vmatpush1.msra.mxu0 0.0
    %1331 = vmatprep.subr.mxu0 0.0
    %1332 = vmatpush1.msra.mxu0 0.0
    %1333 = vmatprep.subr.mxu0 0.0
    %1334 = vmatpush1.msra.mxu0 0.0
    %1335 = vmatprep.subr.mxu0 0.0
    %1336 = vmatpush1.msra.mxu0 0.0
    %1337 = vmatprep.subr.mxu0 0.0
    %1338 = vmatpush1.msra.mxu0 0.0
    %1339 = vmatprep.subr.mxu0 0.0
    %1340 = vmatpush1.msra.mxu0 0.0
    %1341 = vmatprep.subr.mxu0 0.0
    %1342 = vmatpush1.msra.mxu0 0.0
    %1343 = vmatprep.mubr.f32.mxu0 0.0
    %1344 = vmatmul.mubr.f32.gmra.mrb[0].mxu0 %v1277
    %v1345 = vpop.f32.mrb[0].mxu0
    %v1346 = vadd.f32 0.0, %v1345
    %v1347 = vpop.f32.mrb[0].mxu0
    %1348 = vdwg.mxu0
    %1349 = vrot.lane.b32.xlu0 %v145, 104
    %v1350 = vpop.permute.xlu0 %1349
    %1351 = vrot.lane.b32.xlu0 %v141, 72
    %v1352 = vpop.permute.xlu0 %1351
    %v1353 = vsel %vm152, %v1350, 0
    %v1355 = vsel %vm152, %v1352, 0
    %1357 = vmatprep.subr.mxu0 0.0
    %1358 = vmatpush1.xpose.msra.mxu0 %v1355
    %1359 = vmatprep.subr.mxu0 0.0
    %1360 = vmatpush1.xpose.msra.mxu0 0.0
    %1361 = vmatprep.subr.mxu0 0.0
    %1362 = vmatpush1.xpose.msra.mxu0 0.0
    %1363 = vmatprep.subr.mxu0 0.0
    %1364 = vmatpush1.xpose.msra.mxu0 0.0
    %1365 = vmatprep.subr.mxu0 0.0
    %1366 = vmatpush1.xpose.msra.mxu0 0.0
    %1367 = vmatprep.subr.mxu0 0.0
    %1368 = vmatpush1.xpose.msra.mxu0 0.0
    %1369 = vmatprep.subr.mxu0 0.0
    %1370 = vmatpush1.xpose.msra.mxu0 0.0
    %1371 = vmatprep.subr.mxu0 0.0
    %1372 = vmatpush1.xpose.msra.mxu0 0.0
    %1373 = vmatprep.subr.mxu0 0.0
    %1374 = vmatpush1.xpose.msra.mxu0 0.0
    %1375 = vmatprep.subr.mxu0 0.0
    %1376 = vmatpush1.xpose.msra.mxu0 0.0
    %1377 = vmatprep.subr.mxu0 0.0
    %1378 = vmatpush1.xpose.msra.mxu0 0.0
    %1379 = vmatprep.subr.mxu0 0.0
    %1380 = vmatpush1.xpose.msra.mxu0 0.0
    %1381 = vmatprep.subr.mxu0 0.0
    %1382 = vmatpush1.xpose.msra.mxu0 0.0
    %1383 = vmatprep.subr.mxu0 0.0
    %1384 = vmatpush1.xpose.msra.mxu0 0.0
    %1385 = vmatprep.subr.mxu0 0.0
    %1386 = vmatpush1.xpose.msra.mxu0 0.0
    %1387 = vmatprep.subr.mxu0 0.0
    %1388 = vmatpush1.xpose.msra.mxu0 0.0
    %1389 = vmatprep.subr.mxu0 0.0
    %1390 = vmatpush1.xpose.msra.mxu0 0.0
    %1391 = vmatprep.subr.mxu0 0.0
    %1392 = vmatpush1.xpose.msra.mxu0 0.0
    %1393 = vmatprep.subr.mxu0 0.0
    %1394 = vmatpush1.xpose.msra.mxu0 0.0
    %1395 = vmatprep.subr.mxu0 0.0
    %1396 = vmatpush1.xpose.msra.mxu0 0.0
    %1397 = vmatprep.subr.mxu0 0.0
    %1398 = vmatpush1.xpose.msra.mxu0 0.0
    %1399 = vmatprep.subr.mxu0 0.0
    %1400 = vmatpush1.xpose.msra.mxu0 0.0
    %1401 = vmatprep.subr.mxu0 0.0
    %1402 = vmatpush1.xpose.msra.mxu0 0.0
    %1403 = vmatprep.subr.mxu0 0.0
    %1404 = vmatpush1.xpose.msra.mxu0 0.0
    %1405 = vmatprep.subr.mxu0 0.0
    %1406 = vmatpush1.xpose.msra.mxu0 0.0
    %1407 = vmatprep.subr.mxu0 0.0
    %1408 = vmatpush1.xpose.msra.mxu0 0.0
    %1409 = vmatprep.subr.mxu0 0.0
    %1410 = vmatpush1.xpose.msra.mxu0 0.0
    %1411 = vmatprep.subr.mxu0 0.0
    %1412 = vmatpush1.xpose.msra.mxu0 0.0
    %1413 = vmatprep.subr.mxu0 0.0
    %1414 = vmatpush1.xpose.msra.mxu0 0.0
    %1415 = vmatprep.subr.mxu0 0.0
    %1416 = vmatpush1.xpose.msra.mxu0 0.0
    %1417 = vmatprep.subr.mxu0 0.0
    %1418 = vmatpush1.xpose.msra.mxu0 0.0
    %1419 = vmatprep.subr.mxu0 0.0
    %1420 = vmatpush1.xpose.msra.mxu0 0.0
    %1421 = vmatprep.mubr.f32.mxu0 0.0
    %1422 = vmatmul.mubr.f32.gmra.mrb[0].mxu0 %v1353
    %v1423 = vpop.f32.mrb[0].mxu0
    %v1424 = vadd.f32 0.0, %v1423
    %v1425 = vpop.f32.mrb[0].mxu0
    %1426 = vdwg.mxu0
    %v1427 = vsub.f32 %v1424, %v928
    %v1428 = vsel %vm152, %v1427, -inf
    %1429 = vmax.xlane.f32.xlu0 %v1428
    %v1430 = vpop.xlane.xlu0 %1429
    %v1431 = vsub.f32 %v1427, %v1430
    %v1432 = vmul.f32 %v1431, 1.442695
    %v1433 = vpow.pop %v1432
    %v1434 = vsel %vm152, %v1433, 0.0
    %1435 = vadd.xlane.f32.xlu0 %v1434
    %v1436 = vpop.xlane.xlu0 %1435
    %v1437 = vrcp.pop %v1436
    %v1438 = vmul.f32 %v1433, %v1437
    %1439 = vrot.lane.b32.xlu0 %v141, 40
    %v1440 = vpop.permute.xlu0 %1439
    %v1443 = vsel %vm152, %v1438, 0
    %1445 = vmatprep.subr.mxu0 0.0
    %1446 = vmatpush1.msra.mxu0 %v1440
    %1447 = vmatprep.subr.mxu0 0.0
    %1448 = vmatpush1.msra.mxu0 0.0
    %1449 = vmatprep.subr.mxu0 0.0
    %1450 = vmatpush1.msra.mxu0 0.0
    %1451 = vmatprep.subr.mxu0 0.0
    %1452 = vmatpush1.msra.mxu0 0.0
    %1453 = vmatprep.subr.mxu0 0.0
    %1454 = vmatpush1.msra.mxu0 0.0
    %1455 = vmatprep.subr.mxu0 0.0
    %1456 = vmatpush1.msra.mxu0 0.0
    %1457 = vmatprep.subr.mxu0 0.0
    %1458 = vmatpush1.msra.mxu0 0.0
    %1459 = vmatprep.subr.mxu0 0.0
    %1460 = vmatpush1.msra.mxu0 0.0
    %1461 = vmatprep.subr.mxu0 0.0
    %1462 = vmatpush1.msra.mxu0 0.0
    %1463 = vmatprep.subr.mxu0 0.0
    %1464 = vmatpush1.msra.mxu0 0.0
    %1465 = vmatprep.subr.mxu0 0.0
    %1466 = vmatpush1.msra.mxu0 0.0
    %1467 = vmatprep.subr.mxu0 0.0
    %1468 = vmatpush1.msra.mxu0 0.0
    %1469 = vmatprep.subr.mxu0 0.0
    %1470 = vmatpush1.msra.mxu0 0.0
    %1471 = vmatprep.subr.mxu0 0.0
    %1472 = vmatpush1.msra.mxu0 0.0
    %1473 = vmatprep.subr.mxu0 0.0
    %1474 = vmatpush1.msra.mxu0 0.0
    %1475 = vmatprep.subr.mxu0 0.0
    %1476 = vmatpush1.msra.mxu0 0.0
    %1477 = vmatprep.subr.mxu0 0.0
    %1478 = vmatpush1.msra.mxu0 0.0
    %1479 = vmatprep.subr.mxu0 0.0
    %1480 = vmatpush1.msra.mxu0 0.0
    %1481 = vmatprep.subr.mxu0 0.0
    %1482 = vmatpush1.msra.mxu0 0.0
    %1483 = vmatprep.subr.mxu0 0.0
    %1484 = vmatpush1.msra.mxu0 0.0
    %1485 = vmatprep.subr.mxu0 0.0
    %1486 = vmatpush1.msra.mxu0 0.0
    %1487 = vmatprep.subr.mxu0 0.0
    %1488 = vmatpush1.msra.mxu0 0.0
    %1489 = vmatprep.subr.mxu0 0.0
    %1490 = vmatpush1.msra.mxu0 0.0
    %1491 = vmatprep.subr.mxu0 0.0
    %1492 = vmatpush1.msra.mxu0 0.0
    %1493 = vmatprep.subr.mxu0 0.0
    %1494 = vmatpush1.msra.mxu0 0.0
    %1495 = vmatprep.subr.mxu0 0.0
    %1496 = vmatpush1.msra.mxu0 0.0
    %1497 = vmatprep.subr.mxu0 0.0
    %1498 = vmatpush1.msra.mxu0 0.0
    %1499 = vmatprep.subr.mxu0 0.0
    %1500 = vmatpush1.msra.mxu0 0.0
    %1501 = vmatprep.subr.mxu0 0.0
    %1502 = vmatpush1.msra.mxu0 0.0
    %1503 = vmatprep.subr.mxu0 0.0
    %1504 = vmatpush1.msra.mxu0 0.0
    %1505 = vmatprep.subr.mxu0 0.0
    %1506 = vmatpush1.msra.mxu0 0.0
    %1507 = vmatprep.subr.mxu0 0.0
    %1508 = vmatpush1.msra.mxu0 0.0
    %1509 = vmatprep.mubr.f32.mxu0 0.0
    %1510 = vmatmul.mubr.f32.gmra.mrb[0].mxu0 %v1443
    %v1511 = vpop.f32.mrb[0].mxu0
    %v1512 = vadd.f32 0.0, %v1511
    %v1513 = vpop.f32.mrb[0].mxu0
    %1514 = vdwg.mxu0
    %1516 = vrot.lane.b32.xlu0 %v1180, 8
    %v1517 = vpop.permute.xlu0 %1516
    %1520 = vrot.lane.b32.xlu0 %v1346, 16
    %v1521 = vpop.permute.xlu0 %1520
    %1524 = vrot.lane.b32.xlu0 %v1512, 24
    %v1525 = vpop.permute.xlu0 %1524
    %v1527 = vsel %vm152, %v1014, %v1517
    %v1528 = vsel %vm831, %v1527, %v1521
    %v1529 = vsel %vm833, %v1528, %v1525
    %1530 = vrot.lane.b32.xlu0 %v1106, 8
    %v1531 = vpop.permute.xlu0 %1530
    %1533 = vrot.lane.b32.xlu0 %v1272, 16
    %v1534 = vpop.permute.xlu0 %1533
    %1536 = vrot.lane.b32.xlu0 %v1438, 24
    %v1537 = vpop.permute.xlu0 %1536
    %v1539 = vsel %vm152, %v940, %v1531
    %v1540 = vsel %vm831, %v1539, %v1534
    %v1541 = vsel %vm833, %v1540, %v1537
    %1542 = vst.msk [vmem:[#allocation7] sm:$0xff] %vm62, %v834
    %1543 = vst.msk [vmem:[#allocation7 + $0x8] sm:$0xff] %vm62, %v1529
    %1544 = vst.msk [vmem:[#allocation8] sm:$0xff] %vm62, %v846
    %1545 = vst.msk [vmem:[#allocation8 + $0x8] sm:$0xff] %vm62, %v1541
    // Predicated region
    $region26: #{tpu_custom_call.1} parent=1 // pred_check
      _
    $region27: #{tpu_custom_call.1} parent=1 // pred_check_branch
      %1547 = sbr.rel (0) target = $region29
    $region28: #{tpu_custom_call.1} parent=1 // pred_region
      %s1549 = ssub.s32 256, 256
      %1550 = vsyncadd [#allocation4], %s1549
      %s1551 = sshll.u32 [#allocation7], 4
      %s1552 = int_to_ptr.vmem [resolvable:$true] %s1551
      %1557 = dma.vmem_to_hbm [thread:$0]  %s1552, 256, %s4, [#allocation4], 128, 128, 8
    $region29: #{tpu_custom_call.1} parent=1 // pred_fallthru
      _
    // Predicated region
    $region30: #{tpu_custom_call.1} parent=1 // pred_check
      _
    $region31: #{tpu_custom_call.1} parent=1 // pred_check_branch
      %1559 = sbr.rel (0) target = $region33
    $region32: #{tpu_custom_call.1} parent=1 // pred_region
      %s1561 = ssub.s32 256, 256
      %1562 = vsyncadd [#allocation9], %s1561
      %s1563 = sshll.u32 [#allocation8], 4
      %s1564 = int_to_ptr.vmem [resolvable:$true] %s1563
      %1569 = dma.vmem_to_hbm [thread:$0]  %s1564, 256, %s5, [#allocation9], 128, 128, 8
    $region33: #{tpu_custom_call.1} parent=1 // pred_fallthru
      _
    // Predicated region
    $region34: #{tpu_custom_call.1} parent=1 // pred_check
      _
    $region35: #{tpu_custom_call.1} parent=1 // pred_check_branch
      %1571 = sbr.rel (0) target = $region37
    $region36: #{tpu_custom_call.1} parent=1 // pred_region
      %1572 = dma.done [#allocation4], 256
    $region37: #{tpu_custom_call.1} parent=1 // pred_fallthru
      _
    // Predicated region
    $region38: #{tpu_custom_call.1} parent=1 // pred_check
      _
    $region39: #{tpu_custom_call.1} parent=1 // pred_check_branch
      %1574 = sbr.rel (0) target = $region41
    $region40: #{tpu_custom_call.1} parent=1 // pred_region
      %1575 = dma.done [#allocation9], 256
    $region41: #{tpu_custom_call.1} parent=1 // pred_fallthru
      _
    %1576 = vsyncpa [#allocation3], 1
    %1577 = vsyncpa [#allocation6], 1
    %1578 = vsyncpa [#allocation4], 1
    %1579 = vsyncpa [#allocation9], 1

</llo_original>
